<compile_context>
chip_gen: v5e
topology: v5e:2x2
jax: 0.10.0
libtpu: 0.0.40
codegen_flags: <defaults>
</compile_context>

<pallas_src>
import jax
import jax.numpy as jnp
from jax.experimental import pallas as pl
from jax.experimental.pallas import tpu as pltpu

BN_EPS = 1e-5
LRELU_SLOPE = 0.2
VMEM_LIMIT = 32 * 1024 * 1024


# ---------------------------------------------------------------------------
# Pallas kernels (all GEMMs transposed: out[Cout, M] = W[Cout, K] @ P_T[K, M])
# ---------------------------------------------------------------------------
def convT_lrelu_kernel(p_ref, w_ref, o_ref):
    """Conv (transposed im2col GEMM) + LeakyReLU.  Tiled over M (lane axis)."""
    acc = jnp.dot(w_ref[...], p_ref[...], preferred_element_type=jnp.float32)
    o_ref[...] = jnp.where(acc > 0, acc, LRELU_SLOPE * acc).astype(o_ref.dtype)


def convT_bn_lrelu_kernel(p_ref, w_ref, g_ref, b_ref, o_ref):
    """Conv GEMM + BatchNorm (batch stats over M = N*Ho*Wo lanes) + LeakyReLU.

    p:[K,M] bf16, w:[Cout,K] bf16, g/b:[Cout,1] f32, o:[Cout,M] bf16.
    Statistics need the full M extent, hence a single block (fine for M<=512).
    """
    acc = jnp.dot(w_ref[...], p_ref[...], preferred_element_type=jnp.float32)
    mean = jnp.mean(acc, axis=1, keepdims=True)           # per-channel (rows)
    cent = acc - mean
    var = jnp.mean(cent * cent, axis=1, keepdims=True)    # biased, PyTorch train mode
    y = cent * jax.lax.rsqrt(var + BN_EPS) * g_ref[...] + b_ref[...]
    o_ref[...] = jnp.where(y > 0, y, LRELU_SLOPE * y).astype(o_ref.dtype)


def convT_bn_lrelu_head_kernel(p_ref, w_ref, g_ref, b_ref, w5_ref, grp_ref, o_ref):
    """conv4 GEMM + BN4 + LeakyReLU with conv5 (full 4x4 dot) + sigmoid fused in.

    p:[K4,M4] bf16, w:[C4,K4] bf16, g/b:[C4,1] f32,
    w5:[C4,M4] f32 (conv5 weights replicated per sample along M),
    grp:[M4,128] f32 one-hot sample-grouping matrix,
    o:[1,128] f32 -- column n (< N) holds sigmoid(logit_n).
    """
    acc = jnp.dot(w_ref[...], p_ref[...], preferred_element_type=jnp.float32)
    mean = jnp.mean(acc, axis=1, keepdims=True)
    cent = acc - mean
    var = jnp.mean(cent * cent, axis=1, keepdims=True)
    y = cent * jax.lax.rsqrt(var + BN_EPS) * g_ref[...] + b_ref[...]
    y = jnp.where(y > 0, y, LRELU_SLOPE * y)
    # conv5: logit[n] = sum_{c,s} y[c, n*16+s] * w5[c, s]; grp does the per-sample
    # segment sum as a small matmul, then reduce over channels and sigmoid.
    prod = y * w5_ref[...]                                                      # [C4, M4]
    per_chan = jnp.dot(prod, grp_ref[...], preferred_element_type=jnp.float32)  # [C4, 128]
    logits = jnp.sum(per_chan, axis=0, keepdims=True)                           # [1, 128]
    o_ref[...] = jax.nn.sigmoid(logits)


# ---------------------------------------------------------------------------
# Glue: transposed im2col (CNHW in, [K, M] out) + layer wrappers
# ---------------------------------------------------------------------------
def im2col_T(x_cnhw, kh, kw, stride, pad):
    """x: [C, N, H, W] -> patches_T [C*kh*kw, N*Ho*Wo].

    K order (c, i, j) matches the PyTorch weight reshape [Cout, C*kh*kw];
    M order is n*Ho*Wo + oh*Wo + ow, matching the CNHW activation layout.
    """
    c, n, h, w = x_cnhw.shape
    xp = jnp.pad(x_cnhw, ((0, 0), (0, 0), (pad, pad), (pad, pad)))
    ho = (h + 2 * pad - kh) // stride + 1
    wo = (w + 2 * pad - kw) // stride + 1
    slabs = []
    for i in range(kh):
        for j in range(kw):
            slabs.append(xp[:, :, i:i + stride * ho:stride, j:j + stride * wo:stride])
    p = jnp.stack(slabs, axis=1)                          # [C, kh*kw, N, Ho, Wo]
    return p.reshape(c * kh * kw, n * ho * wo), ho, wo


def _mosaic_params(semantics):
    return pltpu.CompilerParams(dimension_semantics=semantics,
                                vmem_limit_bytes=VMEM_LIMIT)


def _full(shape):
    return pl.BlockSpec(shape, lambda i: (0, 0))


def _tile_m(m):
    for t in (512, 256, 128):
        if m % t == 0 and m > t:
            return t
    return m


def conv_lrelu(x_cnhw, w, *, stride=2, pad=1):
    """Layer 1: conv + LeakyReLU, M-tiled grid (parallel)."""
    cout, _, kh, kw = w.shape
    n = x_cnhw.shape[1]
    p, ho, wo = im2col_T(x_cnhw, kh, kw, stride, pad)
    k, m = p.shape
    p = p.astype(jnp.bfloat16)
    wmat = w.reshape(cout, k).astype(jnp.bfloat16)
    tm = _tile_m(m)
    out = pl.pallas_call(
        convT_lrelu_kernel,
        grid=(m // tm,),
        in_specs=[pl.BlockSpec((k, tm), lambda i: (0, i)),
                  pl.BlockSpec((cout, k), lambda i: (0, 0))],
        out_specs=pl.BlockSpec((cout, tm), lambda i: (0, i)),
        out_shape=jax.ShapeDtypeStruct((cout, m), jnp.bfloat16),
        compiler_params=_mosaic_params(("parallel",)),
    )(p, wmat)
    return out.reshape(cout, n, ho, wo)


def conv_bn_lrelu(x_cnhw, w, gamma, beta, *, stride=2, pad=1):
    """Layers 2/3: conv + BatchNorm(batch stats) + LeakyReLU, single block
    (full-M statistics; M <= 512 at these shapes)."""
    cout, _, kh, kw = w.shape
    n = x_cnhw.shape[1]
    p, ho, wo = im2col_T(x_cnhw, kh, kw, stride, pad)
    k, m = p.shape
    p = p.astype(jnp.bfloat16)
    wmat = w.reshape(cout, k).astype(jnp.bfloat16)
    g = gamma.reshape(cout, 1).astype(jnp.float32)
    b = beta.reshape(cout, 1).astype(jnp.float32)
    out = pl.pallas_call(
        convT_bn_lrelu_kernel,
        grid=(1,),
        in_specs=[_full((k, m)), _full((cout, k)), _full((cout, 1)), _full((cout, 1))],
        out_specs=_full((cout, m)),
        out_shape=jax.ShapeDtypeStruct((cout, m), jnp.bfloat16),
        compiler_params=_mosaic_params(("arbitrary",)),
    )(p, wmat, g, b)
    return out.reshape(cout, n, ho, wo)


def conv_bn_lrelu_sigmoid_head(x_cnhw, w4, gamma, beta, w5):
    """Layers 4+5 fused: conv4 + BN4 + LeakyReLU + conv5 + sigmoid."""
    cout, _, kh, kw = w4.shape
    n = x_cnhw.shape[1]
    assert n <= 128, "fused head packs one sample per output lane (N <= 128)"
    p, ho, wo = im2col_T(x_cnhw, kh, kw, 2, 1)
    assert (ho, wo) == (4, 4), "DCGAN head expects a 4x4 feature map (64x64 input)"
    k, m = p.shape                                        # m = n * 16
    p = p.astype(jnp.bfloat16)
    wmat = w4.reshape(cout, k).astype(jnp.bfloat16)
    g = gamma.reshape(cout, 1).astype(jnp.float32)
    b = beta.reshape(cout, 1).astype(jnp.float32)
    # conv5 weights [1, C4, 4, 4] -> [C4, 16], replicated per sample along M.
    w5_rep = jnp.tile(w5.reshape(cout, ho * wo).astype(jnp.float32), (1, n))   # [C4, M]
    # one-hot grouping: grp[m, q] = 1 iff column m belongs to sample q.
    grp = (jnp.arange(m)[:, None] // (ho * wo)
           == jnp.arange(128)[None, :]).astype(jnp.float32)                    # [M, 128]
    out = pl.pallas_call(
        convT_bn_lrelu_head_kernel,
        grid=(1,),
        in_specs=[_full((k, m)), _full((cout, k)), _full((cout, 1)), _full((cout, 1)),
                  _full((cout, m)), _full((m, 128))],
        out_specs=_full((1, 128)),
        out_shape=jax.ShapeDtypeStruct((1, 128), jnp.float32),
        compiler_params=_mosaic_params(("arbitrary",)),
    )(p, wmat, g, b, w5_rep, grp)
    return out[0, :n].reshape(n, 1, 1, 1)


# ---------------------------------------------------------------------------
# Discriminator forward
# ---------------------------------------------------------------------------
def init_params(key, nc=3, ndf=8):
    ks = jax.random.split(key, 5)
    std = 0.02  # DCGAN-style init, deterministic given the key
    return {
        "w1": jax.random.normal(ks[0], (ndf, nc, 4, 4), jnp.float32) * std,
        "w2": jax.random.normal(ks[1], (ndf * 2, ndf, 4, 4), jnp.float32) * std,
        "w3": jax.random.normal(ks[2], (ndf * 4, ndf * 2, 4, 4), jnp.float32) * std,
        "w4": jax.random.normal(ks[3], (ndf * 8, ndf * 4, 4, 4), jnp.float32) * std,
        "w5": jax.random.normal(ks[4], (1, ndf * 8, 4, 4), jnp.float32) * std,
        # BatchNorm2d default init: weight=1, bias=0
        "g2": jnp.ones((ndf * 2,), jnp.float32), "b2": jnp.zeros((ndf * 2,), jnp.float32),
        "g3": jnp.ones((ndf * 4,), jnp.float32), "b3": jnp.zeros((ndf * 4,), jnp.float32),
        "g4": jnp.ones((ndf * 8,), jnp.float32), "b4": jnp.zeros((ndf * 8,), jnp.float32),
    }


def discriminator_forward(x_nchw, params):
    a = x_nchw.transpose(1, 0, 2, 3)                            # NCHW -> CNHW, once
    a = conv_lrelu(a, params["w1"])                             # [ndf,  N, 32, 32]
    a = conv_bn_lrelu(a, params["w2"], params["g2"], params["b2"])   # [2ndf, N, 16, 16]
    a = conv_bn_lrelu(a, params["w3"], params["g3"], params["b3"])   # [4ndf, N,  8,  8]
    return conv_bn_lrelu_sigmoid_head(a, params["w4"], params["g4"],
                                      params["b4"], params["w5"])    # [N, 1, 1, 1]


if __name__ == "__main__":
    key = jax.random.PRNGKey(0)
    kp, kx = jax.random.split(key)

    # DCGAN discriminator requires 64x64 input so conv5 (4x4, stride 1, pad 0)
    # collapses the 4x4 feature map to 1x1.  Small sizes: N=2, nc=3, ndf=8.
    N, NC, NDF = 2, 3, 8
    x = jax.random.normal(kx, (N, NC, 64, 64), jnp.float32)
    params = init_params(kp, nc=NC, ndf=NDF)

    fwd = jax.jit(discriminator_forward)
    out = jax.block_until_ready(fwd(x, params))

    assert out.shape == (N, 1, 1, 1), out.shape
    assert bool(jnp.all(jnp.isfinite(out))), "non-finite output"
    assert bool(jnp.all((out >= 0.0) & (out <= 1.0))), "sigmoid output out of range"
    print("KERNEL_OK")
</pallas_src>

<mosaic_0001>
module attributes {stable_mosaic.version = 11 : i64} {
  func.func @convT_lrelu_kernel(%arg0: i32, %arg1: memref<48x512xbf16, #tpu.memory_space<vmem>>, %arg2: memref<8x48xbf16, #tpu.memory_space<vmem>>, %arg3: memref<8x512xbf16, #tpu.memory_space<vmem>>) attributes {dimension_semantics = [#tpu.dimension_semantics<parallel>], iteration_bounds = array<i64: 4>, scalar_prefetch = 0 : i64, scratch_operands = 0 : i64, tpu.core_type = #tpu.core_type<tc>, window_params = [{transform_indices = @transform_0, window_bounds = array<i64: 48, 512>}, {pipeline_mode = #tpu.pipeline_mode<synchronous>, transform_indices = @transform_1, window_bounds = array<i64: 8, 48>}, {transform_indices = @transform_2, window_bounds = array<i64: 8, 512>}]} {
    %c0 = arith.constant 0 : index
    %c0_0 = arith.constant 0 : index
    %0 = vector.load %arg2[%c0, %c0_0] : memref<8x48xbf16, #tpu.memory_space<vmem>>, vector<8x48xbf16>
    %c0_1 = arith.constant 0 : index
    %c0_2 = arith.constant 0 : index
    %1 = vector.load %arg1[%c0_1, %c0_2] : memref<48x512xbf16, #tpu.memory_space<vmem>>, vector<48x512xbf16>
    %cst = arith.constant dense<0.000000e+00> : vector<8x512xf32>
    %2 = tpu.matmul %0, %1, %cst {dimension_numbers = #tpu.dot_dimension_numbers<[1], [0], [0], [1], [0, 0, 1, 1], [], []>} : vector<8x48xbf16>, vector<48x512xbf16>, vector<8x512xf32> -> vector<8x512xf32>
    %cst_3 = arith.constant 0.000000e+00 : f32
    %3 = vector.broadcast %cst_3 : f32 to vector<8x512xf32>
    %4 = arith.cmpf ogt, %2, %3 : vector<8x512xf32>
    %cst_4 = arith.constant 2.000000e-01 : f32
    %5 = vector.broadcast %cst_4 : f32 to vector<8x512xf32>
    %6 = arith.mulf %5, %2 : vector<8x512xf32>
    %7 = arith.select %4, %2, %6 : vector<8x512xi1>, vector<8x512xf32>
    %8 = arith.truncf %7 : vector<8x512xf32> to vector<8x512xbf16>
    %c0_5 = arith.constant 0 : index
    %c0_6 = arith.constant 0 : index
    %9 = vector.load %arg3[%c0_5, %c0_6] : memref<8x512xbf16, #tpu.memory_space<vmem>>, vector<8x512xbf16>
    tpu.vector_store %arg3[%c0_5, %c0_6], %8 {strides = array<i32>} : memref<8x512xbf16, #tpu.memory_space<vmem>>, vector<8x512xbf16>,
    return
  }
  func.func @transform_0(%arg0: i32) -> (i32, i32) {
    %c0_i32 = arith.constant 0 : i32
    %c0_i32_0 = arith.constant 0 : i32
    return %c0_i32, %arg0 : i32, i32
  }
  func.func @transform_1(%arg0: i32) -> (i32, i32) {
    %c0_i32 = arith.constant 0 : i32
    %c0_i32_0 = arith.constant 0 : i32
    %c0_i32_1 = arith.constant 0 : i32
    return %c0_i32, %c0_i32_0 : i32, i32
  }
  func.func @transform_2(%arg0: i32) -> (i32, i32) {
    %c0_i32 = arith.constant 0 : i32
    %c0_i32_0 = arith.constant 0 : i32
    return %c0_i32, %arg0 : i32, i32
  }
}

module attributes {stable_mosaic.version = 11 : i64} {
  func.func @convT_bn_lrelu_kernel(%arg0: i32, %arg1: memref<128x512xbf16, #tpu.memory_space<vmem>>, %arg2: memref<16x128xbf16, #tpu.memory_space<vmem>>, %arg3: memref<16x1xf32, #tpu.memory_space<vmem>>, %arg4: memref<16x1xf32, #tpu.memory_space<vmem>>, %arg5: memref<16x512xbf16, #tpu.memory_space<vmem>>) attributes {dimension_semantics = [#tpu.dimension_semantics<arbitrary>], iteration_bounds = array<i64: 1>, scalar_prefetch = 0 : i64, scratch_operands = 0 : i64, tpu.core_type = #tpu.core_type<tc>, window_params = [{pipeline_mode = #tpu.pipeline_mode<synchronous>, transform_indices = @transform_0, window_bounds = array<i64: 128, 512>}, {pipeline_mode = #tpu.pipeline_mode<synchronous>, transform_indices = @transform_1, window_bounds = array<i64: 16, 128>}, {pipeline_mode = #tpu.pipeline_mode<synchronous>, transform_indices = @transform_2, window_bounds = array<i64: 16, 1>}, {pipeline_mode = #tpu.pipeline_mode<synchronous>, transform_indices = @transform_3, window_bounds = array<i64: 16, 1>}, {pipeline_mode = #tpu.pipeline_mode<synchronous>, transform_indices = @transform_4, window_bounds = array<i64: 16, 512>}]} {
    %c0 = arith.constant 0 : index
    %c0_0 = arith.constant 0 : index
    %0 = vector.load %arg2[%c0, %c0_0] : memref<16x128xbf16, #tpu.memory_space<vmem>>, vector<16x128xbf16>
    %c0_1 = arith.constant 0 : index
    %c0_2 = arith.constant 0 : index
    %1 = vector.load %arg1[%c0_1, %c0_2] : memref<128x512xbf16, #tpu.memory_space<vmem>>, vector<128x512xbf16>
    %cst = arith.constant dense<0.000000e+00> : vector<16x512xf32>
    %2 = tpu.matmul %0, %1, %cst {dimension_numbers = #tpu.dot_dimension_numbers<[1], [0], [0], [1], [0, 0, 1, 1], [], []>} : vector<16x128xbf16>, vector<128x512xbf16>, vector<16x512xf32> -> vector<16x512xf32>
    %cst_3 = arith.constant dense<0.000000e+00> : vector<16xf32>
    %3 = vector.multi_reduction <add>, %2, %cst_3 [1] : vector<16x512xf32> to vector<16xf32>
    %4 = vector.shape_cast %3 : vector<16xf32> to vector<16x1xf32>
    %cst_4 = arith.constant 5.120000e+02 : f32
    %5 = vector.broadcast %cst_4 : f32 to vector<16x1xf32>
    %6 = arith.divf %4, %5 : vector<16x1xf32>
    %7 = vector.broadcast %6 : vector<16x1xf32> to vector<16x512xf32>
    %8 = arith.subf %2, %7 : vector<16x512xf32>
    %9 = arith.mulf %8, %8 : vector<16x512xf32>
    %cst_5 = arith.constant dense<0.000000e+00> : vector<16xf32>
    %10 = vector.multi_reduction <add>, %9, %cst_5 [1] : vector<16x512xf32> to vector<16xf32>
    %11 = vector.shape_cast %10 : vector<16xf32> to vector<16x1xf32>
    %cst_6 = arith.constant 5.120000e+02 : f32
    %12 = vector.broadcast %cst_6 : f32 to vector<16x1xf32>
    %13 = arith.divf %11, %12 : vector<16x1xf32>
    %cst_7 = arith.constant 9.99999974E-6 : f32
    %14 = vector.broadcast %cst_7 : f32 to vector<16x1xf32>
    %15 = arith.addf %13, %14 : vector<16x1xf32>
    %16 = math.rsqrt %15 : vector<16x1xf32>
    %17 = vector.broadcast %16 : vector<16x1xf32> to vector<16x512xf32>
    %18 = arith.mulf %8, %17 : vector<16x512xf32>
    %c0_8 = arith.constant 0 : index
    %c0_9 = arith.constant 0 : index
    %19 = vector.load %arg3[%c0_8, %c0_9] : memref<16x1xf32, #tpu.memory_space<vmem>>, vector<16x1xf32>
    %20 = vector.broadcast %19 : vector<16x1xf32> to vector<16x512xf32>
    %21 = arith.mulf %18, %20 : vector<16x512xf32>
    %c0_10 = arith.constant 0 : index
    %c0_11 = arith.constant 0 : index
    %22 = vector.load %arg4[%c0_10, %c0_11] : memref<16x1xf32, #tpu.memory_space<vmem>>, vector<16x1xf32>
    %23 = vector.broadcast %22 : vector<16x1xf32> to vector<16x512xf32>
    %24 = arith.addf %21, %23 : vector<16x512xf32>
    %cst_12 = arith.constant 0.000000e+00 : f32
    %25 = vector.broadcast %cst_12 : f32 to vector<16x512xf32>
    %26 = arith.cmpf ogt, %24, %25 : vector<16x512xf32>
    %cst_13 = arith.constant 2.000000e-01 : f32
    %27 = vector.broadcast %cst_13 : f32 to vector<16x512xf32>
    %28 = arith.mulf %27, %24 : vector<16x512xf32>
    %29 = arith.select %26, %24, %28 : vector<16x512xi1>, vector<16x512xf32>
    %30 = arith.truncf %29 : vector<16x512xf32> to vector<16x512xbf16>
    %c0_14 = arith.constant 0 : index
    %c0_15 = arith.constant 0 : index
    %31 = vector.load %arg5[%c0_14, %c0_15] : memref<16x512xbf16, #tpu.memory_space<vmem>>, vector<16x512xbf16>
    tpu.vector_store %arg5[%c0_14, %c0_15], %30 {strides = array<i32>} : memref<16x512xbf16, #tpu.memory_space<vmem>>, vector<16x512xbf16>,
    return
  }
  func.func @transform_0(%arg0: i32) -> (i32, i32) {
    %c0_i32 = arith.constant 0 : i32
    %c0_i32_0 = arith.constant 0 : i32
    %c0_i32_1 = arith.constant 0 : i32
    return %c0_i32, %c0_i32_0 : i32, i32
  }
  func.func @transform_1(%arg0: i32) -> (i32, i32) {
    %c0_i32 = arith.constant 0 : i32
    %c0_i32_0 = arith.constant 0 : i32
    %c0_i32_1 = arith.constant 0 : i32
    return %c0_i32, %c0_i32_0 : i32, i32
  }
  func.func @transform_2(%arg0: i32) -> (i32, i32) {
    %c0_i32 = arith.constant 0 : i32
    %c0_i32_0 = arith.constant 0 : i32
    %c0_i32_1 = arith.constant 0 : i32
    return %c0_i32, %c0_i32_0 : i32, i32
  }
  func.func @transform_3(%arg0: i32) -> (i32, i32) {
    %c0_i32 = arith.constant 0 : i32
    %c0_i32_0 = arith.constant 0 : i32
    %c0_i32_1 = arith.constant 0 : i32
    return %c0_i32, %c0_i32_0 : i32, i32
  }
  func.func @transform_4(%arg0: i32) -> (i32, i32) {
    %c0_i32 = arith.constant 0 : i32
    %c0_i32_0 = arith.constant 0 : i32
    %c0_i32_1 = arith.constant 0 : i32
    return %c0_i32, %c0_i32_0 : i32, i32
  }
}

module attributes {stable_mosaic.version = 11 : i64} {
  func.func @convT_bn_lrelu_kernel(%arg0: i32, %arg1: memref<256x128xbf16, #tpu.memory_space<vmem>>, %arg2: memref<32x256xbf16, #tpu.memory_space<vmem>>, %arg3: memref<32x1xf32, #tpu.memory_space<vmem>>, %arg4: memref<32x1xf32, #tpu.memory_space<vmem>>, %arg5: memref<32x128xbf16, #tpu.memory_space<vmem>>) attributes {dimension_semantics = [#tpu.dimension_semantics<arbitrary>], iteration_bounds = array<i64: 1>, scalar_prefetch = 0 : i64, scratch_operands = 0 : i64, tpu.core_type = #tpu.core_type<tc>, window_params = [{pipeline_mode = #tpu.pipeline_mode<synchronous>, transform_indices = @transform_0, window_bounds = array<i64: 256, 128>}, {pipeline_mode = #tpu.pipeline_mode<synchronous>, transform_indices = @transform_1, window_bounds = array<i64: 32, 256>}, {pipeline_mode = #tpu.pipeline_mode<synchronous>, transform_indices = @transform_2, window_bounds = array<i64: 32, 1>}, {pipeline_mode = #tpu.pipeline_mode<synchronous>, transform_indices = @transform_3, window_bounds = array<i64: 32, 1>}, {pipeline_mode = #tpu.pipeline_mode<synchronous>, transform_indices = @transform_4, window_bounds = array<i64: 32, 128>}]} {
    %c0 = arith.constant 0 : index
    %c0_0 = arith.constant 0 : index
    %0 = vector.load %arg2[%c0, %c0_0] : memref<32x256xbf16, #tpu.memory_space<vmem>>, vector<32x256xbf16>
    %c0_1 = arith.constant 0 : index
    %c0_2 = arith.constant 0 : index
    %1 = vector.load %arg1[%c0_1, %c0_2] : memref<256x128xbf16, #tpu.memory_space<vmem>>, vector<256x128xbf16>
    %cst = arith.constant dense<0.000000e+00> : vector<32x128xf32>
    %2 = tpu.matmul %0, %1, %cst {dimension_numbers = #tpu.dot_dimension_numbers<[1], [0], [0], [1], [0, 0, 1, 1], [], []>} : vector<32x256xbf16>, vector<256x128xbf16>, vector<32x128xf32> -> vector<32x128xf32>
    %cst_3 = arith.constant dense<0.000000e+00> : vector<32xf32>
    %3 = vector.multi_reduction <add>, %2, %cst_3 [1] : vector<32x128xf32> to vector<32xf32>
    %4 = vector.shape_cast %3 : vector<32xf32> to vector<32x1xf32>
    %cst_4 = arith.constant 1.280000e+02 : f32
    %5 = vector.broadcast %cst_4 : f32 to vector<32x1xf32>
    %6 = arith.divf %4, %5 : vector<32x1xf32>
    %7 = vector.broadcast %6 : vector<32x1xf32> to vector<32x128xf32>
    %8 = arith.subf %2, %7 : vector<32x128xf32>
    %9 = arith.mulf %8, %8 : vector<32x128xf32>
    %cst_5 = arith.constant dense<0.000000e+00> : vector<32xf32>
    %10 = vector.multi_reduction <add>, %9, %cst_5 [1] : vector<32x128xf32> to vector<32xf32>
    %11 = vector.shape_cast %10 : vector<32xf32> to vector<32x1xf32>
    %cst_6 = arith.constant 1.280000e+02 : f32
    %12 = vector.broadcast %cst_6 : f32 to vector<32x1xf32>
    %13 = arith.divf %11, %12 : vector<32x1xf32>
    %cst_7 = arith.constant 9.99999974E-6 : f32
    %14 = vector.broadcast %cst_7 : f32 to vector<32x1xf32>
    %15 = arith.addf %13, %14 : vector<32x1xf32>
    %16 = math.rsqrt %15 : vector<32x1xf32>
    %17 = vector.broadcast %16 : vector<32x1xf32> to vector<32x128xf32>
    %18 = arith.mulf %8, %17 : vector<32x128xf32>
    %c0_8 = arith.constant 0 : index
    %c0_9 = arith.constant 0 : index
    %19 = vector.load %arg3[%c0_8, %c0_9] : memref<32x1xf32, #tpu.memory_space<vmem>>, vector<32x1xf32>
    %20 = vector.broadcast %19 : vector<32x1xf32> to vector<32x128xf32>
    %21 = arith.mulf %18, %20 : vector<32x128xf32>
    %c0_10 = arith.constant 0 : index
    %c0_11 = arith.constant 0 : index
    %22 = vector.load %arg4[%c0_10, %c0_11] : memref<32x1xf32, #tpu.memory_space<vmem>>, vector<32x1xf32>
    %23 = vector.broadcast %22 : vector<32x1xf32> to vector<32x128xf32>
    %24 = arith.addf %21, %23 : vector<32x128xf32>
    %cst_12 = arith.constant 0.000000e+00 : f32
    %25 = vector.broadcast %cst_12 : f32 to vector<32x128xf32>
    %26 = arith.cmpf ogt, %24, %25 : vector<32x128xf32>
    %cst_13 = arith.constant 2.000000e-01 : f32
    %27 = vector.broadcast %cst_13 : f32 to vector<32x128xf32>
    %28 = arith.mulf %27, %24 : vector<32x128xf32>
    %29 = arith.select %26, %24, %28 : vector<32x128xi1>, vector<32x128xf32>
    %30 = arith.truncf %29 : vector<32x128xf32> to vector<32x128xbf16>
    %c0_14 = arith.constant 0 : index
    %c0_15 = arith.constant 0 : index
    %31 = vector.load %arg5[%c0_14, %c0_15] : memref<32x128xbf16, #tpu.memory_space<vmem>>, vector<32x128xbf16>
    tpu.vector_store %arg5[%c0_14, %c0_15], %30 {strides = array<i32>} : memref<32x128xbf16, #tpu.memory_space<vmem>>, vector<32x128xbf16>,
    return
  }
  func.func @transform_0(%arg0: i32) -> (i32, i32) {
    %c0_i32 = arith.constant 0 : i32
    %c0_i32_0 = arith.constant 0 : i32
    %c0_i32_1 = arith.constant 0 : i32
    return %c0_i32, %c0_i32_0 : i32, i32
  }
  func.func @transform_1(%arg0: i32) -> (i32, i32) {
    %c0_i32 = arith.constant 0 : i32
    %c0_i32_0 = arith.constant 0 : i32
    %c0_i32_1 = arith.constant 0 : i32
    return %c0_i32, %c0_i32_0 : i32, i32
  }
  func.func @transform_2(%arg0: i32) -> (i32, i32) {
    %c0_i32 = arith.constant 0 : i32
    %c0_i32_0 = arith.constant 0 : i32
    %c0_i32_1 = arith.constant 0 : i32
    return %c0_i32, %c0_i32_0 : i32, i32
  }
  func.func @transform_3(%arg0: i32) -> (i32, i32) {
    %c0_i32 = arith.constant 0 : i32
    %c0_i32_0 = arith.constant 0 : i32
    %c0_i32_1 = arith.constant 0 : i32
    return %c0_i32, %c0_i32_0 : i32, i32
  }
  func.func @transform_4(%arg0: i32) -> (i32, i32) {
    %c0_i32 = arith.constant 0 : i32
    %c0_i32_0 = arith.constant 0 : i32
    %c0_i32_1 = arith.constant 0 : i32
    return %c0_i32, %c0_i32_0 : i32, i32
  }
}

module attributes {stable_mosaic.version = 11 : i64} {
  func.func @convT_bn_lrelu_head_kernel(%arg0: i32, %arg1: memref<512x32xbf16, #tpu.memory_space<vmem>>, %arg2: memref<64x512xbf16, #tpu.memory_space<vmem>>, %arg3: memref<64x1xf32, #tpu.memory_space<vmem>>, %arg4: memref<64x1xf32, #tpu.memory_space<vmem>>, %arg5: memref<64x32xf32, #tpu.memory_space<vmem>>, %arg6: memref<32x128xf32, #tpu.memory_space<vmem>>, %arg7: memref<1x128xf32, #tpu.memory_space<vmem>>) attributes {dimension_semantics = [#tpu.dimension_semantics<arbitrary>], iteration_bounds = array<i64: 1>, scalar_prefetch = 0 : i64, scratch_operands = 0 : i64, tpu.core_type = #tpu.core_type<tc>, window_params = [{pipeline_mode = #tpu.pipeline_mode<synchronous>, transform_indices = @transform_0, window_bounds = array<i64: 512, 32>}, {pipeline_mode = #tpu.pipeline_mode<synchronous>, transform_indices = @transform_1, window_bounds = array<i64: 64, 512>}, {pipeline_mode = #tpu.pipeline_mode<synchronous>, transform_indices = @transform_2, window_bounds = array<i64: 64, 1>}, {pipeline_mode = #tpu.pipeline_mode<synchronous>, transform_indices = @transform_3, window_bounds = array<i64: 64, 1>}, {pipeline_mode = #tpu.pipeline_mode<synchronous>, transform_indices = @transform_4, window_bounds = array<i64: 64, 32>}, {pipeline_mode = #tpu.pipeline_mode<synchronous>, transform_indices = @transform_5, window_bounds = array<i64: 32, 128>}, {pipeline_mode = #tpu.pipeline_mode<synchronous>, transform_indices = @transform_6, window_bounds = array<i64: 1, 128>}]} {
    %c0 = arith.constant 0 : index
    %c0_0 = arith.constant 0 : index
    %0 = vector.load %arg2[%c0, %c0_0] : memref<64x512xbf16, #tpu.memory_space<vmem>>, vector<64x512xbf16>
    %c0_1 = arith.constant 0 : index
    %c0_2 = arith.constant 0 : index
    %1 = vector.load %arg1[%c0_1, %c0_2] : memref<512x32xbf16, #tpu.memory_space<vmem>>, vector<512x32xbf16>
    %cst = arith.constant dense<0.000000e+00> : vector<64x32xf32>
    %2 = tpu.matmul %0, %1, %cst {dimension_numbers = #tpu.dot_dimension_numbers<[1], [0], [0], [1], [0, 0, 1, 1], [], []>} : vector<64x512xbf16>, vector<512x32xbf16>, vector<64x32xf32> -> vector<64x32xf32>
    %cst_3 = arith.constant dense<0.000000e+00> : vector<64xf32>
    %3 = vector.multi_reduction <add>, %2, %cst_3 [1] : vector<64x32xf32> to vector<64xf32>
    %4 = vector.shape_cast %3 : vector<64xf32> to vector<64x1xf32>
    %cst_4 = arith.constant 3.200000e+01 : f32
    %5 = vector.broadcast %cst_4 : f32 to vector<64x1xf32>
    %6 = arith.divf %4, %5 : vector<64x1xf32>
    %7 = vector.broadcast %6 : vector<64x1xf32> to vector<64x32xf32>
    %8 = arith.subf %2, %7 : vector<64x32xf32>
    %9 = arith.mulf %8, %8 : vector<64x32xf32>
    %cst_5 = arith.constant dense<0.000000e+00> : vector<64xf32>
    %10 = vector.multi_reduction <add>, %9, %cst_5 [1] : vector<64x32xf32> to vector<64xf32>
    %11 = vector.shape_cast %10 : vector<64xf32> to vector<64x1xf32>
    %cst_6 = arith.constant 3.200000e+01 : f32
    %12 = vector.broadcast %cst_6 : f32 to vector<64x1xf32>
    %13 = arith.divf %11, %12 : vector<64x1xf32>
    %cst_7 = arith.constant 9.99999974E-6 : f32
    %14 = vector.broadcast %cst_7 : f32 to vector<64x1xf32>
    %15 = arith.addf %13, %14 : vector<64x1xf32>
    %16 = math.rsqrt %15 : vector<64x1xf32>
    %17 = vector.broadcast %16 : vector<64x1xf32> to vector<64x32xf32>
    %18 = arith.mulf %8, %17 : vector<64x32xf32>
    %c0_8 = arith.constant 0 : index
    %c0_9 = arith.constant 0 : index
    %19 = vector.load %arg3[%c0_8, %c0_9] : memref<64x1xf32, #tpu.memory_space<vmem>>, vector<64x1xf32>
    %20 = vector.broadcast %19 : vector<64x1xf32> to vector<64x32xf32>
    %21 = arith.mulf %18, %20 : vector<64x32xf32>
    %c0_10 = arith.constant 0 : index
    %c0_11 = arith.constant 0 : index
    %22 = vector.load %arg4[%c0_10, %c0_11] : memref<64x1xf32, #tpu.memory_space<vmem>>, vector<64x1xf32>
    %23 = vector.broadcast %22 : vector<64x1xf32> to vector<64x32xf32>
    %24 = arith.addf %21, %23 : vector<64x32xf32>
    %cst_12 = arith.constant 0.000000e+00 : f32
    %25 = vector.broadcast %cst_12 : f32 to vector<64x32xf32>
    %26 = arith.cmpf ogt, %24, %25 : vector<64x32xf32>
    %cst_13 = arith.constant 2.000000e-01 : f32
    %27 = vector.broadcast %cst_13 : f32 to vector<64x32xf32>
    %28 = arith.mulf %27, %24 : vector<64x32xf32>
    %29 = arith.select %26, %24, %28 : vector<64x32xi1>, vector<64x32xf32>
    %c0_14 = arith.constant 0 : index
    %c0_15 = arith.constant 0 : index
    %30 = vector.load %arg5[%c0_14, %c0_15] : memref<64x32xf32, #tpu.memory_space<vmem>>, vector<64x32xf32>
    %31 = arith.mulf %29, %30 : vector<64x32xf32>
    %c0_16 = arith.constant 0 : index
    %c0_17 = arith.constant 0 : index
    %32 = vector.load %arg6[%c0_16, %c0_17] : memref<32x128xf32, #tpu.memory_space<vmem>>, vector<32x128xf32>
    %cst_18 = arith.constant dense<0.000000e+00> : vector<64x128xf32>
    %33 = tpu.matmul %31, %32, %cst_18 {dimension_numbers = #tpu.dot_dimension_numbers<[1], [0], [0], [1], [0, 0, 1, 1], [], []>} : vector<64x32xf32>, vector<32x128xf32>, vector<64x128xf32> -> vector<64x128xf32>
    %cst_19 = arith.constant dense<0.000000e+00> : vector<128xf32>
    %34 = vector.multi_reduction <add>, %33, %cst_19 [0] : vector<64x128xf32> to vector<128xf32>
    %35 = vector.shape_cast %34 : vector<128xf32> to vector<1x128xf32>
    %36 = arith.negf %35 : vector<1x128xf32>
    %37 = math.exp %36 : vector<1x128xf32>
    %cst_20 = arith.constant 1.000000e+00 : f32
    %38 = vector.broadcast %cst_20 : f32 to vector<1x128xf32>
    %39 = arith.addf %38, %37 : vector<1x128xf32>
    %40 = arith.divf %38, %39 : vector<1x128xf32>
    %c0_21 = arith.constant 0 : index
    %c0_22 = arith.constant 0 : index
    %41 = vector.load %arg7[%c0_21, %c0_22] : memref<1x128xf32, #tpu.memory_space<vmem>>, vector<1x128xf32>
    tpu.vector_store %arg7[%c0_21, %c0_22], %40 {strides = array<i32>} : memref<1x128xf32, #tpu.memory_space<vmem>>, vector<1x128xf32>,
    return
  }
  func.func @transform_0(%arg0: i32) -> (i32, i32) {
    %c0_i32 = arith.constant 0 : i32
    %c0_i32_0 = arith.constant 0 : i32
    %c0_i32_1 = arith.constant 0 : i32
    return %c0_i32, %c0_i32_0 : i32, i32
  }
  func.func @transform_1(%arg0: i32) -> (i32, i32) {
    %c0_i32 = arith.constant 0 : i32
    %c0_i32_0 = arith.constant 0 : i32
    %c0_i32_1 = arith.constant 0 : i32
    return %c0_i32, %c0_i32_0 : i32, i32
  }
  func.func @transform_2(%arg0: i32) -> (i32, i32) {
    %c0_i32 = arith.constant 0 : i32
    %c0_i32_0 = arith.constant 0 : i32
    %c0_i32_1 = arith.constant 0 : i32
    return %c0_i32, %c0_i32_0 : i32, i32
  }
  func.func @transform_3(%arg0: i32) -> (i32, i32) {
    %c0_i32 = arith.constant 0 : i32
    %c0_i32_0 = arith.constant 0 : i32
    %c0_i32_1 = arith.constant 0 : i32
    return %c0_i32, %c0_i32_0 : i32, i32
  }
  func.func @transform_4(%arg0: i32) -> (i32, i32) {
    %c0_i32 = arith.constant 0 : i32
    %c0_i32_0 = arith.constant 0 : i32
    %c0_i32_1 = arith.constant 0 : i32
    return %c0_i32, %c0_i32_0 : i32, i32
  }
  func.func @transform_5(%arg0: i32) -> (i32, i32) {
    %c0_i32 = arith.constant 0 : i32
    %c0_i32_0 = arith.constant 0 : i32
    %c0_i32_1 = arith.constant 0 : i32
    return %c0_i32, %c0_i32_0 : i32, i32
  }
  func.func @transform_6(%arg0: i32) -> (i32, i32) {
    %c0_i32 = arith.constant 0 : i32
    %c0_i32_0 = arith.constant 0 : i32
    %c0_i32_1 = arith.constant 0 : i32
    return %c0_i32, %c0_i32_0 : i32, i32
  }
}

</mosaic_0001>

<llo_original>
// kernel: discriminator_forward.4
$region0: #{discriminator_forward.4}
  #allocation0 [shape = 'u32[]', space=smem, size = 0x4, offset = 0x4, fixed_abs, tag = 'smem constant byte address 0x4 - core index']
  #allocation1 [shape = 'u32[72,128]{1,0:T(1,128)}', space=vmem, size = 0x9000, scoped, tag = 'internal scratch']
  %s0 = inlined_call_operand.vmem [shape: bf16[48,2048], index: 0, kind: input, shape index: {}]
  %s1 = inlined_call_operand.vmem [shape: bf16[8,48], index: 1, kind: input, shape index: {}]
  %s2 = inlined_call_operand.vmem [shape: bf16[8,2048], index: 2, kind: output, shape index: {}]
  %s3 = sld [smem:[#allocation0]]
  $region64: #{discriminator_forward.4} parent=0
    _
  %s5 = ssub.s32 1, %s3
  %s6 = scalar_select 0, %s5, %s3
  $region1: #{discriminator_forward.4} parent=0
    #allocation2 [shape = 'u8[98304]{0}', space=vmem, size = 0x18000, scoped, tag = 'input window, operand 0']
    loop: start=0, step=1, limit=6
    $region2: #{discriminator_forward.4} parent=1 // loop_pre_header
      _
    $region3: #{discriminator_forward.4} parent=1 // loop_header
      %s8 = sphi 0, %s12
      %p9 = scmp.ge.s32.totalorder %s8, 6
      %s18 = sphi 0, %s20
      %s21 = sphi 0, %s18
      %s22 = sphi 0, %s21
      %s38 = sphi 0, %s22
      %s42 = sphi 0, %s42
      %s44 = sphi 0, %s42
      %s45 = sphi 0, %s44
      %s59 = sphi 0, %s45
      %s65 = sphi 0, %s67
      %s68 = sphi 0, %s65
      %s69 = sphi 0, %s68
      %s85 = sphi 0, %s69
    $region4: #{discriminator_forward.4} parent=1 // loop_header_branch
      %11 = sbr.rel (%p9) target = $region8
    $region5: #{discriminator_forward.4} parent=1 // loop_body
      %s13 = ssub.s32 %s8, 1
      %s14 = ssub.s32 %s8, 2
      %s15 = sadd.s32 %s8, 1
      %s16 = ssub.s32 %s8, %s15
      %p17 = scmp.eq.s32.totalorder %s16, 0
      %s19 = sadd.s32 %s18, 1
      %s20 = scalar_select %p17, %s18, %s19
      %p23 = pneg %p17
      %p24 = scmp.eq.s32.totalorder %s8, 3
      %p25 = por %p23, %p24
      %p26 = scmp.ne.s32.totalorder %s18, %s21
      %p27 = scmp.eq.s32.totalorder %s8, 0
      %p28 = por %p26, %p27
      %p29 = scmp.ne.s32.totalorder %s18, %s21
      %p30 = scmp.eq.s32.totalorder %s13, 3
      %p31 = por %p29, %p30
      %p32 = scmp.ne.s32.totalorder %s21, %s22
      %p33 = scmp.eq.s32.totalorder %s13, 0
      %p34 = por %p32, %p33
      %p35 = scmp.ne.s32.totalorder %s21, %s22
      %p36 = scmp.eq.s32.totalorder %s14, 3
      %p37 = por %p35, %p36
      %p39 = scmp.ne.s32.totalorder %s22, %s38
      %p40 = scmp.eq.s32.totalorder %s14, 0
      %p41 = por %p39, %p40
      %s43 = sadd.s32 %s42, 1
      %p46 = scmp.eq.s32.totalorder %s8, 3
      %p47 = scmp.ne.s32.totalorder %s42, %s44
      %p48 = scmp.eq.s32.totalorder %s8, 0
      %p49 = por %p47, %p48
      %p50 = scmp.ne.s32.totalorder %s42, %s44
      %p51 = scmp.eq.s32.totalorder %s13, 3
      %p52 = por %p50, %p51
      %p53 = scmp.ne.s32.totalorder %s44, %s45
      %p54 = scmp.eq.s32.totalorder %s13, 0
      %p55 = por %p53, %p54
      %p56 = scmp.ne.s32.totalorder %s44, %s45
      %p57 = scmp.eq.s32.totalorder %s14, 3
      %p58 = por %p56, %p57
      %p60 = scmp.ne.s32.totalorder %s45, %s59
      %p61 = scmp.eq.s32.totalorder %s14, 0
      %p62 = por %p60, %p61
      %s63 = ssub.s32 %s8, %s15
      %p64 = scmp.eq.s32.totalorder %s63, 0
      %s66 = sadd.s32 %s65, 1
      %s67 = scalar_select %p64, %s65, %s66
      %p70 = pneg %p64
      %p71 = scmp.eq.s32.totalorder %s8, 3
      %p72 = por %p70, %p71
      %p73 = scmp.ne.s32.totalorder %s65, %s68
      %p74 = scmp.eq.s32.totalorder %s8, 0
      %p75 = por %p73, %p74
      %p76 = scmp.ne.s32.totalorder %s65, %s68
      %p77 = scmp.eq.s32.totalorder %s13, 3
      %p78 = por %p76, %p77
      %p79 = scmp.ne.s32.totalorder %s68, %s69
      %p80 = scmp.eq.s32.totalorder %s13, 0
      %p81 = por %p79, %p80
      %p82 = scmp.ne.s32.totalorder %s68, %s69
      %p83 = scmp.eq.s32.totalorder %s14, 3
      %p84 = por %p82, %p83
      %p86 = scmp.ne.s32.totalorder %s69, %s85
      %p87 = scmp.eq.s32.totalorder %s14, 0
      %p88 = por %p86, %p87
      %p89 = scmp.le.s32.totalorder 1, %s8
      %p90 = scmp.lt.s32.totalorder %s8, 5
      %p91 = pnand %p89, %p90
      %p92 = pneg %p91
      // Predicated region
      $region9: #{discriminator_forward.4} parent=5 // pred_check
        _
      $region10: #{discriminator_forward.4} parent=5 // pred_check_branch
        %94 = sbr.rel (%p91) target = $region12
      $region11: #{discriminator_forward.4} parent=5 // pred_region
        %s95 = ssub.s32 %s8, 1
        // Predicated region
        $region13: #{discriminator_forward.4} parent=11 // pred_check
          %p96 = pneg %p55
        $region14: #{discriminator_forward.4} parent=11 // pred_check_branch
          %98 = sbr.rel (%p96) target = $region16
        $region15: #{discriminator_forward.4} parent=11 // pred_region
          _
        $region16: #{discriminator_forward.4} parent=11 // pred_fallthru
          _
      $region12: #{discriminator_forward.4} parent=5 // pred_fallthru
        _
      %p99 = scmp.lt.s32.totalorder %s8, 4
      // Predicated region
      $region17: #{discriminator_forward.4} parent=5 // pred_check
        %p100 = pneg %p99
      $region18: #{discriminator_forward.4} parent=5 // pred_check_branch
        %102 = sbr.rel (%p100) target = $region20
      $region19: #{discriminator_forward.4} parent=5 // pred_region
        // Predicated region
        $region21: #{discriminator_forward.4} parent=19 // pred_check
          %p103 = pneg %p28
        $region22: #{discriminator_forward.4} parent=19 // pred_check_branch
          %105 = sbr.rel (%p103) target = $region24
        $region23: #{discriminator_forward.4} parent=19 // pred_region
          %s106 = sand.u32 %s18, 1
          %s107 = sand.u32 %s18, 1
          %s108 = smul.addr %s107, 96
          %s109 = scalar_lea.vmem [#allocation2], %s108
          %s110 = smul.u32 4, %s8
          %s111 = smul.addr %s110, 4
          %s112 = scalar_lea.vmem %s0, %s111
          // Predicated region
          $region25: #{discriminator_forward.4} parent=23 // pred_check
            _
          $region26: #{discriminator_forward.4} parent=23 // pred_check_branch
            %114 = sbr.rel (0) target = $region28
          $region27: #{discriminator_forward.4} parent=23 // pred_region
            // Predicated region
            $region29: #{discriminator_forward.4} parent=27 // pred_check
              _
            $region30: #{discriminator_forward.4} parent=27 // pred_check_branch
              %116 = sbr.rel (0) target = $region32
            $region31: #{discriminator_forward.4} parent=27 // pred_region
              loop: start=0, step=1, limit=1
              $region33: #{discriminator_forward.4} parent=31 // loop_pre_header
                _
              $region34: #{discriminator_forward.4} parent=31 // loop_header
                %s118 = sphi 0, %s122
                %p119 = scmp.ge.s32.totalorder %s118, 1
                %s123 = sphi %s112, %s112
                %s124 = sphi %s109, %s109
              $region35: #{discriminator_forward.4} parent=31 // loop_header_branch
                %121 = sbr.rel (%p119) target = $region39
              $region36: #{discriminator_forward.4} parent=31 // loop_body
                %v125 = vld [vmem:[%s123] sm:$0xff]
                %126 = vst [vmem:[%s124] sm:$0xff] %v125
                %v127 = vld [vmem:[%s123 + $0x8] sm:$0xff]
                %128 = vst [vmem:[%s124 + $0x8] sm:$0xff] %v127
                %v129 = vld [vmem:[%s123 + $0x40] sm:$0xff]
                %130 = vst [vmem:[%s124 + $0x10] sm:$0xff] %v129
                %v131 = vld [vmem:[%s123 + $0x48] sm:$0xff]
                %132 = vst [vmem:[%s124 + $0x18] sm:$0xff] %v131
                %v133 = vld [vmem:[%s123 + $0x80] sm:$0xff]
                %134 = vst [vmem:[%s124 + $0x20] sm:$0xff] %v133
                %v135 = vld [vmem:[%s123 + $0x88] sm:$0xff]
                %136 = vst [vmem:[%s124 + $0x28] sm:$0xff] %v135
                %v137 = vld [vmem:[%s123 + $0xc0] sm:$0xff]
                %138 = vst [vmem:[%s124 + $0x30] sm:$0xff] %v137
                %v139 = vld [vmem:[%s123 + $0xc8] sm:$0xff]
                %140 = vst [vmem:[%s124 + $0x38] sm:$0xff] %v139
                %v141 = vld [vmem:[%s123 + $0x100] sm:$0xff]
                %142 = vst [vmem:[%s124 + $0x40] sm:$0xff] %v141
                %v143 = vld [vmem:[%s123 + $0x108] sm:$0xff]
                %144 = vst [vmem:[%s124 + $0x48] sm:$0xff] %v143
                %v145 = vld [vmem:[%s123 + $0x140] sm:$0xff]
                %146 = vst [vmem:[%s124 + $0x50] sm:$0xff] %v145
                %v147 = vld [vmem:[%s123 + $0x148] sm:$0xff]
                %148 = vst [vmem:[%s124 + $0x58] sm:$0xff] %v147
              $region37: #{discriminator_forward.4} parent=31 // loop_footer
                %s122 = sadd.s32 1, %s118
              $region38: #{discriminator_forward.4} parent=31 // loop_footer_branch
                %117 = sbr.rel target = $region34
              $region39: #{discriminator_forward.4} parent=31 // loop_exit
                _
            $region32: #{discriminator_forward.4} parent=27 // pred_fallthru
              _
            // Predicated region
            $region40: #{discriminator_forward.4} parent=27 // pred_check
              _
            $region41: #{discriminator_forward.4} parent=27 // pred_check_branch
              %150 = sbr.rel target = $region43
            $region42: #{discriminator_forward.4} parent=27 // pred_region
              _
            $region43: #{discriminator_forward.4} parent=27 // pred_fallthru
              _
          $region28: #{discriminator_forward.4} parent=23 // pred_fallthru
            _
          %151 = vnop
        $region24: #{discriminator_forward.4} parent=19 // pred_fallthru
          _
      $region20: #{discriminator_forward.4} parent=5 // pred_fallthru
        _
      %p152 = scmp.le.s32.totalorder 1, %s8
      %p153 = scmp.lt.s32.totalorder %s8, 5
      %p154 = pnand %p152, %p153
      %p155 = pneg %p154
      // Predicated region
      $region44: #{discriminator_forward.4} parent=5 // pred_check
        _
      $region45: #{discriminator_forward.4} parent=5 // pred_check_branch
        %157 = sbr.rel (%p154) target = $region47
      $region46: #{discriminator_forward.4} parent=5 // pred_region
        %s158 = ssub.s32 %s8, 1
        %s159 = sand.u32 %s21, 1
        %s160 = sand.u32 %s21, 1
        %s161 = smul.addr %s160, 96
        %s162 = scalar_lea.vmem [#allocation2], %s161
        // Predicated region
        $region48: #{discriminator_forward.4} parent=46 // pred_check
          %p163 = pneg %p34
        $region49: #{discriminator_forward.4} parent=46 // pred_check_branch
          %165 = sbr.rel (%p163) target = $region51
        $region50: #{discriminator_forward.4} parent=46 // pred_region
          _
        $region51: #{discriminator_forward.4} parent=46 // pred_fallthru
          _
        %s166 = sand.u32 %s21, 1
        %s167 = sand.u32 %s21, 1
        %s168 = smul.addr %s167, 96
        %s169 = scalar_lea.vmem [#allocation2], %s168
        %p170 = pneg %p34
        %p171 = pneg %p31
        %p172 = pneg %p55
        %p173 = pneg %p52
        %p174 = pneg %p81
        %p175 = pneg %p78
        %s176 = smul.u32 4, %s13
        %p177 = scmp.lt.s32.totalorder %s176, 15
        %s178 = scalar_select %p177, %s176, 15
        %s179 = smul.addr %s178, 4
        %s180 = scalar_lea.vmem %s2, %s179
        %s181 = smul.u32 4, %s13
        %s182 = smul.u32 4, %s13
        %p183 = scmp.lt.s32.totalorder %s182, 15
        %s184 = scalar_select %p183, %s182, 15
        %s185 = smul.addr %s184, 4
        %s186 = scalar_lea.vmem %s2, %s185
        %s187 = smul.u32 4, %s13
        %v189 = vld [vmem:[%s1] sm:$0xf]
        %v190 = vld [vmem:[%s162] sm:$0xff]
        %v191 = vld [vmem:[%s162 + $0x8] sm:$0xff]
        %v192 = vld [vmem:[%s162 + $0x10] sm:$0xff]
        %v193 = vld [vmem:[%s162 + $0x18] sm:$0xff]
        %v194 = vld [vmem:[%s162 + $0x20] sm:$0xff]
        %v195 = vld [vmem:[%s162 + $0x28] sm:$0xff]
        %v196 = vld [vmem:[%s162 + $0x30] sm:$0xff]
        %v197 = vld [vmem:[%s162 + $0x38] sm:$0xff]
        %v198 = vld [vmem:[%s162 + $0x40] sm:$0xff]
        %v199 = vld [vmem:[%s162 + $0x48] sm:$0xff]
        %v200 = vld [vmem:[%s162 + $0x50] sm:$0xff]
        %v201 = vld [vmem:[%s162 + $0x58] sm:$0xff]
        %v214 = vunpack.c.l.b16 %v190
        %v215 = vunpack.c.h.b16 %v190
        %v216 = vunpack.c.l.b16 %v191
        %v217 = vunpack.c.h.b16 %v191
        %v218 = vunpack.c.l.b16 %v192
        %v219 = vunpack.c.h.b16 %v192
        %v220 = vunpack.c.l.b16 %v193
        %v221 = vunpack.c.h.b16 %v193
        %v222 = vunpack.c.l.b16 %v194
        %v223 = vunpack.c.h.b16 %v194
        %v224 = vunpack.c.l.b16 %v195
        %v225 = vunpack.c.h.b16 %v195
        %v226 = vunpack.c.l.b16 %v196
        %v227 = vunpack.c.h.b16 %v196
        %v228 = vunpack.c.l.b16 %v197
        %v229 = vunpack.c.h.b16 %v197
        %v230 = vunpack.c.l.b16 %v198
        %v231 = vunpack.c.h.b16 %v198
        %v232 = vunpack.c.l.b16 %v199
        %v233 = vunpack.c.h.b16 %v199
        %v234 = vunpack.c.l.b16 %v200
        %v235 = vunpack.c.h.b16 %v200
        %v236 = vunpack.c.l.b16 %v201
        %v237 = vunpack.c.h.b16 %v201
        %v238 = vpack.c.b16 %v218, %v214
        %v239 = vpack.c.b16 %v219, %v215
        %v240 = vpack.c.b16 %v220, %v216
        %v241 = vpack.c.b16 %v221, %v217
        %v242 = vpack.c.b16 %v226, %v222
        %v243 = vpack.c.b16 %v227, %v223
        %v244 = vpack.c.b16 %v228, %v224
        %v245 = vpack.c.b16 %v229, %v225
        %v246 = vpack.c.b16 %v234, %v230
        %v247 = vpack.c.b16 %v235, %v231
        %v248 = vpack.c.b16 %v236, %v232
        %v249 = vpack.c.b16 %v237, %v233
        %vm262 = vcmask 392192
        %v264 = vsel %vm262, %v189, 0
        %266 = vmatpush.bf16.msra.mxu0 0
        %267 = vmatpush.bf16.msra.mxu0 0
        %268 = vmatpush.bf16.msra.mxu0 0
        %269 = vmatpush.bf16.msra.mxu0 0
        %270 = vmatpush.bf16.msra.mxu0 0
        %271 = vmatpush.bf16.msra.mxu0 %v246
        %272 = vmatpush.bf16.msra.mxu0 %v242
        %273 = vmatpush.bf16.msra.mxu0 %v238
        %274 = vmatmul.bf16.gmra.mxu0 %v264
        %v275 = vpop.f32.mrf.mxu0
        %v276 = vadd.f32 0.0, %v275
        %v277 = vpop.f32.mrf.mxu0
        %278 = vdwg.mxu0
        %279 = vmatpush.bf16.msra.mxu0 0
        %280 = vmatpush.bf16.msra.mxu0 0
        %281 = vmatpush.bf16.msra.mxu0 0
        %282 = vmatpush.bf16.msra.mxu0 0
        %283 = vmatpush.bf16.msra.mxu0 0
        %284 = vmatpush.bf16.msra.mxu0 %v247
        %285 = vmatpush.bf16.msra.mxu0 %v243
        %286 = vmatpush.bf16.msra.mxu0 %v239
        %287 = vmatmul.bf16.gmra.mxu0 %v264
        %v288 = vpop.f32.mrf.mxu0
        %v289 = vadd.f32 0.0, %v288
        %v290 = vpop.f32.mrf.mxu0
        %291 = vdwg.mxu0
        %292 = vmatpush.bf16.msra.mxu0 0
        %293 = vmatpush.bf16.msra.mxu0 0
        %294 = vmatpush.bf16.msra.mxu0 0
        %295 = vmatpush.bf16.msra.mxu0 0
        %296 = vmatpush.bf16.msra.mxu0 0
        %297 = vmatpush.bf16.msra.mxu0 %v248
        %298 = vmatpush.bf16.msra.mxu0 %v244
        %299 = vmatpush.bf16.msra.mxu0 %v240
        %300 = vmatmul.bf16.gmra.mxu0 %v264
        %v301 = vpop.f32.mrf.mxu0
        %v302 = vadd.f32 0.0, %v301
        %v303 = vpop.f32.mrf.mxu0
        %304 = vdwg.mxu0
        %305 = vmatpush.bf16.msra.mxu0 0
        %306 = vmatpush.bf16.msra.mxu0 0
        %307 = vmatpush.bf16.msra.mxu0 0
        %308 = vmatpush.bf16.msra.mxu0 0
        %309 = vmatpush.bf16.msra.mxu0 0
        %310 = vmatpush.bf16.msra.mxu0 %v249
        %311 = vmatpush.bf16.msra.mxu0 %v245
        %312 = vmatpush.bf16.msra.mxu0 %v241
        %313 = vmatmul.bf16.gmra.mxu0 %v264
        %v314 = vpop.f32.mrf.mxu0
        %v315 = vadd.f32 0.0, %v314
        %v316 = vpop.f32.mrf.mxu0
        %317 = vdwg.mxu0
        %vm318 = vcmp.gt.f32.partialorder %v276, 0.0
        %vm319 = vcmp.gt.f32.partialorder %v289, 0.0
        %vm320 = vcmp.gt.f32.partialorder %v302, 0.0
        %vm321 = vcmp.gt.f32.partialorder %v315, 0.0
        %v322 = vmul.f32 %v276, 0.2
        %v323 = vmul.f32 %v289, 0.2
        %v324 = vmul.f32 %v302, 0.2
        %v325 = vmul.f32 %v315, 0.2
        %v326 = vsel %vm318, %v276, %v322
        %v327 = vsel %vm319, %v289, %v323
        %v328 = vsel %vm320, %v302, %v324
        %v329 = vsel %vm321, %v315, %v325
        %v330 = vpack.c.bf16 %v327, %v326
        %v331 = vpack.c.bf16 %v329, %v328
        %332 = vst [vmem:[%s186] sm:$0xff] %v330
        %333 = vst [vmem:[%s186 + $0x8] sm:$0xff] %v331
        %s334 = smul.u32 4, %s13
        %p335 = scmp.lt.s32.totalorder %s334, 15
        %s336 = scalar_select %p335, %s334, 15
        %s337 = smul.addr %s336, 4
        %s338 = scalar_lea.vmem %s2, %s337
        // Predicated region
        $region52: #{discriminator_forward.4} parent=46 // pred_check
          %p339 = pneg %p78
        $region53: #{discriminator_forward.4} parent=46 // pred_check_branch
          %341 = sbr.rel (%p339) target = $region55
        $region54: #{discriminator_forward.4} parent=46 // pred_region
          %s342 = smul.u32 4, %s13
        $region55: #{discriminator_forward.4} parent=46 // pred_fallthru
          _
      $region47: #{discriminator_forward.4} parent=5 // pred_fallthru
        _
      %p343 = scmp.le.s32.totalorder 2, %s8
      // Predicated region
      $region56: #{discriminator_forward.4} parent=5 // pred_check
        %p344 = pneg %p343
      $region57: #{discriminator_forward.4} parent=5 // pred_check_branch
        %346 = sbr.rel (%p344) target = $region59
      $region58: #{discriminator_forward.4} parent=5 // pred_region
        %s347 = ssub.s32 %s8, 2
        // Predicated region
        $region60: #{discriminator_forward.4} parent=58 // pred_check
          %p348 = pneg %p84
        $region61: #{discriminator_forward.4} parent=58 // pred_check_branch
          %350 = sbr.rel (%p348) target = $region63
        $region62: #{discriminator_forward.4} parent=58 // pred_region
          %s351 = smul.u32 4, %s14
          %p352 = scmp.lt.s32.totalorder %s351, 15
          %s353 = scalar_select %p352, %s351, 15
          %s354 = smul.addr %s353, 4
          %s355 = scalar_lea.vmem %s2, %s354
        $region63: #{discriminator_forward.4} parent=58 // pred_fallthru
          _
      $region59: #{discriminator_forward.4} parent=5 // pred_fallthru
        _
    $region6: #{discriminator_forward.4} parent=1 // loop_footer
      %s12 = sadd.s32 1, %s8
    $region7: #{discriminator_forward.4} parent=1 // loop_footer_branch
      %7 = sbr.rel target = $region3
    $region8: #{discriminator_forward.4} parent=1 // loop_exit
      _

// kernel: discriminator_forward.5
$region0: #{discriminator_forward.5}
  #allocation0 [shape = 'u32[]', space=smem, size = 0x4, offset = 0x4, fixed_abs, tag = 'smem constant byte address 0x4 - core index']
  #allocation1 [shape = 'u32[72,128]{1,0:T(1,128)}', space=vmem, size = 0x9000, scoped, tag = 'internal scratch']
  %s0 = inlined_call_operand.vmem [shape: bf16[128,512], index: 0, kind: input, shape index: {}]
  %s1 = inlined_call_operand.vmem [shape: bf16[16,128], index: 1, kind: input, shape index: {}]
  %s2 = inlined_call_operand.vmem [shape: f32[16,1], index: 2, kind: input, shape index: {}]
  %s3 = inlined_call_operand.vmem [shape: f32[16,1], index: 3, kind: input, shape index: {}]
  %s4 = inlined_call_operand.vmem [shape: bf16[16,512], index: 4, kind: output, shape index: {}]
  %s5 = sld [smem:[#allocation0]]
  $region26: #{discriminator_forward.5} parent=0
    _
  %s7 = ssub.s32 1, %s5
  %s8 = scalar_select 0, %s7, %s5
  // Predicated region
  $region2: #{discriminator_forward.5} parent=0 // pred_check
    _
  $region3: #{discriminator_forward.5} parent=0 // pred_check_branch
    %10 = sbr.rel (0) target = $region5
  $region4: #{discriminator_forward.5} parent=0 // pred_region
    _
  $region5: #{discriminator_forward.5} parent=0 // pred_fallthru
    _
  // Predicated region
  $region6: #{discriminator_forward.5} parent=0 // pred_check
    _
  $region7: #{discriminator_forward.5} parent=0 // pred_check_branch
    %12 = sbr.rel (0) target = $region9
  $region8: #{discriminator_forward.5} parent=0 // pred_region
    _
  $region9: #{discriminator_forward.5} parent=0 // pred_fallthru
    _
  // Predicated region
  $region10: #{discriminator_forward.5} parent=0 // pred_check
    _
  $region11: #{discriminator_forward.5} parent=0 // pred_check_branch
    %14 = sbr.rel (0) target = $region13
  $region12: #{discriminator_forward.5} parent=0 // pred_region
    _
  $region13: #{discriminator_forward.5} parent=0 // pred_fallthru
    _
  // Predicated region
  $region14: #{discriminator_forward.5} parent=0 // pred_check
    _
  $region15: #{discriminator_forward.5} parent=0 // pred_check_branch
    %16 = sbr.rel (0) target = $region17
  $region16: #{discriminator_forward.5} parent=0 // pred_region
    _
  $region17: #{discriminator_forward.5} parent=0 // pred_fallthru
    _
  %v17 = vld [vmem:[%s1] sm:$0xf]
  %v18 = vld [vmem:[%s1 + $0x4] sm:$0xf]
  %v19 = vld [vmem:[%s0] sm:$0xff]
  %v20 = vld [vmem:[%s0 + $0x8] sm:$0xff]
  %v21 = vld [vmem:[%s0 + $0x10] sm:$0xff]
  %v22 = vld [vmem:[%s0 + $0x18] sm:$0xff]
  %v23 = vld [vmem:[%s0 + $0x20] sm:$0xff]
  %v24 = vld [vmem:[%s0 + $0x28] sm:$0xff]
  %v25 = vld [vmem:[%s0 + $0x30] sm:$0xff]
  %v26 = vld [vmem:[%s0 + $0x38] sm:$0xff]
  %v27 = vld [vmem:[%s0 + $0x40] sm:$0xff]
  %v28 = vld [vmem:[%s0 + $0x48] sm:$0xff]
  %v29 = vld [vmem:[%s0 + $0x50] sm:$0xff]
  %v30 = vld [vmem:[%s0 + $0x58] sm:$0xff]
  %v31 = vld [vmem:[%s0 + $0x60] sm:$0xff]
  %v32 = vld [vmem:[%s0 + $0x68] sm:$0xff]
  %v33 = vld [vmem:[%s0 + $0x70] sm:$0xff]
  %v34 = vld [vmem:[%s0 + $0x78] sm:$0xff]
  %v35 = vld [vmem:[%s0 + $0x80] sm:$0xff]
  %v36 = vld [vmem:[%s0 + $0x88] sm:$0xff]
  %v37 = vld [vmem:[%s0 + $0x90] sm:$0xff]
  %v38 = vld [vmem:[%s0 + $0x98] sm:$0xff]
  %v39 = vld [vmem:[%s0 + $0xa0] sm:$0xff]
  %v40 = vld [vmem:[%s0 + $0xa8] sm:$0xff]
  %v41 = vld [vmem:[%s0 + $0xb0] sm:$0xff]
  %v42 = vld [vmem:[%s0 + $0xb8] sm:$0xff]
  %v43 = vld [vmem:[%s0 + $0xc0] sm:$0xff]
  %v44 = vld [vmem:[%s0 + $0xc8] sm:$0xff]
  %v45 = vld [vmem:[%s0 + $0xd0] sm:$0xff]
  %v46 = vld [vmem:[%s0 + $0xd8] sm:$0xff]
  %v47 = vld [vmem:[%s0 + $0xe0] sm:$0xff]
  %v48 = vld [vmem:[%s0 + $0xe8] sm:$0xff]
  %v49 = vld [vmem:[%s0 + $0xf0] sm:$0xff]
  %v50 = vld [vmem:[%s0 + $0xf8] sm:$0xff]
  %v53 = vunpack.c.l.b16 %v17
  %v54 = vunpack.c.l.b16 %v18
  %v55 = vpack.c.b16 %v54, %v53
  %v89 = vunpack.c.l.b16 %v19
  %v90 = vunpack.c.h.b16 %v19
  %v91 = vunpack.c.l.b16 %v20
  %v92 = vunpack.c.h.b16 %v20
  %v93 = vunpack.c.l.b16 %v21
  %v94 = vunpack.c.h.b16 %v21
  %v95 = vunpack.c.l.b16 %v22
  %v96 = vunpack.c.h.b16 %v22
  %v97 = vunpack.c.l.b16 %v23
  %v98 = vunpack.c.h.b16 %v23
  %v99 = vunpack.c.l.b16 %v24
  %v100 = vunpack.c.h.b16 %v24
  %v101 = vunpack.c.l.b16 %v25
  %v102 = vunpack.c.h.b16 %v25
  %v103 = vunpack.c.l.b16 %v26
  %v104 = vunpack.c.h.b16 %v26
  %v105 = vunpack.c.l.b16 %v27
  %v106 = vunpack.c.h.b16 %v27
  %v107 = vunpack.c.l.b16 %v28
  %v108 = vunpack.c.h.b16 %v28
  %v109 = vunpack.c.l.b16 %v29
  %v110 = vunpack.c.h.b16 %v29
  %v111 = vunpack.c.l.b16 %v30
  %v112 = vunpack.c.h.b16 %v30
  %v113 = vunpack.c.l.b16 %v31
  %v114 = vunpack.c.h.b16 %v31
  %v115 = vunpack.c.l.b16 %v32
  %v116 = vunpack.c.h.b16 %v32
  %v117 = vunpack.c.l.b16 %v33
  %v118 = vunpack.c.h.b16 %v33
  %v119 = vunpack.c.l.b16 %v34
  %v120 = vunpack.c.h.b16 %v34
  %v121 = vunpack.c.l.b16 %v35
  %v122 = vunpack.c.h.b16 %v35
  %v123 = vunpack.c.l.b16 %v36
  %v124 = vunpack.c.h.b16 %v36
  %v125 = vunpack.c.l.b16 %v37
  %v126 = vunpack.c.h.b16 %v37
  %v127 = vunpack.c.l.b16 %v38
  %v128 = vunpack.c.h.b16 %v38
  %v129 = vunpack.c.l.b16 %v39
  %v130 = vunpack.c.h.b16 %v39
  %v131 = vunpack.c.l.b16 %v40
  %v132 = vunpack.c.h.b16 %v40
  %v133 = vunpack.c.l.b16 %v41
  %v134 = vunpack.c.h.b16 %v41
  %v135 = vunpack.c.l.b16 %v42
  %v136 = vunpack.c.h.b16 %v42
  %v137 = vunpack.c.l.b16 %v43
  %v138 = vunpack.c.h.b16 %v43
  %v139 = vunpack.c.l.b16 %v44
  %v140 = vunpack.c.h.b16 %v44
  %v141 = vunpack.c.l.b16 %v45
  %v142 = vunpack.c.h.b16 %v45
  %v143 = vunpack.c.l.b16 %v46
  %v144 = vunpack.c.h.b16 %v46
  %v145 = vunpack.c.l.b16 %v47
  %v146 = vunpack.c.h.b16 %v47
  %v147 = vunpack.c.l.b16 %v48
  %v148 = vunpack.c.h.b16 %v48
  %v149 = vunpack.c.l.b16 %v49
  %v150 = vunpack.c.h.b16 %v49
  %v151 = vunpack.c.l.b16 %v50
  %v152 = vunpack.c.h.b16 %v50
  %v153 = vpack.c.b16 %v93, %v89
  %v154 = vpack.c.b16 %v94, %v90
  %v155 = vpack.c.b16 %v95, %v91
  %v156 = vpack.c.b16 %v96, %v92
  %v157 = vpack.c.b16 %v101, %v97
  %v158 = vpack.c.b16 %v102, %v98
  %v159 = vpack.c.b16 %v103, %v99
  %v160 = vpack.c.b16 %v104, %v100
  %v161 = vpack.c.b16 %v109, %v105
  %v162 = vpack.c.b16 %v110, %v106
  %v163 = vpack.c.b16 %v111, %v107
  %v164 = vpack.c.b16 %v112, %v108
  %v165 = vpack.c.b16 %v117, %v113
  %v166 = vpack.c.b16 %v118, %v114
  %v167 = vpack.c.b16 %v119, %v115
  %v168 = vpack.c.b16 %v120, %v116
  %v169 = vpack.c.b16 %v125, %v121
  %v170 = vpack.c.b16 %v126, %v122
  %v171 = vpack.c.b16 %v127, %v123
  %v172 = vpack.c.b16 %v128, %v124
  %v173 = vpack.c.b16 %v133, %v129
  %v174 = vpack.c.b16 %v134, %v130
  %v175 = vpack.c.b16 %v135, %v131
  %v176 = vpack.c.b16 %v136, %v132
  %v177 = vpack.c.b16 %v141, %v137
  %v178 = vpack.c.b16 %v142, %v138
  %v179 = vpack.c.b16 %v143, %v139
  %v180 = vpack.c.b16 %v144, %v140
  %v181 = vpack.c.b16 %v149, %v145
  %v182 = vpack.c.b16 %v150, %v146
  %v183 = vpack.c.b16 %v151, %v147
  %v184 = vpack.c.b16 %v152, %v148
  %217 = vmatpush.bf16.msra.mxu0 %v181
  %218 = vmatpush.bf16.msra.mxu0 %v177
  %219 = vmatpush.bf16.msra.mxu0 %v173
  %220 = vmatpush.bf16.msra.mxu0 %v169
  %221 = vmatpush.bf16.msra.mxu0 %v165
  %222 = vmatpush.bf16.msra.mxu0 %v161
  %223 = vmatpush.bf16.msra.mxu0 %v157
  %224 = vmatpush.bf16.msra.mxu0 %v153
  %225 = vmatmul.bf16.gmra.mxu0 %v55
  %v226 = vpop.f32.mrf.mxu0
  %v227 = vadd.f32 0.0, %v226
  %v228 = vpop.f32.mrf.mxu0
  %v229 = vadd.f32 0.0, %v228
  %230 = vdwg.mxu0
  %231 = vmatpush.bf16.msra.mxu0 %v182
  %232 = vmatpush.bf16.msra.mxu0 %v178
  %233 = vmatpush.bf16.msra.mxu0 %v174
  %234 = vmatpush.bf16.msra.mxu0 %v170
  %235 = vmatpush.bf16.msra.mxu0 %v166
  %236 = vmatpush.bf16.msra.mxu0 %v162
  %237 = vmatpush.bf16.msra.mxu0 %v158
  %238 = vmatpush.bf16.msra.mxu0 %v154
  %239 = vmatmul.bf16.gmra.mxu0 %v55
  %v240 = vpop.f32.mrf.mxu0
  %v241 = vadd.f32 0.0, %v240
  %v242 = vpop.f32.mrf.mxu0
  %v243 = vadd.f32 0.0, %v242
  %244 = vdwg.mxu0
  %245 = vmatpush.bf16.msra.mxu0 %v183
  %246 = vmatpush.bf16.msra.mxu0 %v179
  %247 = vmatpush.bf16.msra.mxu0 %v175
  %248 = vmatpush.bf16.msra.mxu0 %v171
  %249 = vmatpush.bf16.msra.mxu0 %v167
  %250 = vmatpush.bf16.msra.mxu0 %v163
  %251 = vmatpush.bf16.msra.mxu0 %v159
  %252 = vmatpush.bf16.msra.mxu0 %v155
  %253 = vmatmul.bf16.gmra.mxu0 %v55
  %v254 = vpop.f32.mrf.mxu0
  %v255 = vadd.f32 0.0, %v254
  %v256 = vpop.f32.mrf.mxu0
  %v257 = vadd.f32 0.0, %v256
  %258 = vdwg.mxu0
  %259 = vmatpush.bf16.msra.mxu0 %v184
  %260 = vmatpush.bf16.msra.mxu0 %v180
  %261 = vmatpush.bf16.msra.mxu0 %v176
  %262 = vmatpush.bf16.msra.mxu0 %v172
  %263 = vmatpush.bf16.msra.mxu0 %v168
  %264 = vmatpush.bf16.msra.mxu0 %v164
  %265 = vmatpush.bf16.msra.mxu0 %v160
  %266 = vmatpush.bf16.msra.mxu0 %v156
  %267 = vmatmul.bf16.gmra.mxu0 %v55
  %v268 = vpop.f32.mrf.mxu0
  %v269 = vadd.f32 0.0, %v268
  %v270 = vpop.f32.mrf.mxu0
  %v271 = vadd.f32 0.0, %v270
  %272 = vdwg.mxu0
  %v273 = vadd.f32 %v227, %v241
  %v274 = vadd.f32 %v273, %v255
  %v275 = vadd.f32 %v274, %v269
  %276 = vadd.xlane.f32.xlu0 %v275
  %v277 = vpop.xlane.xlu0 %276
  %v278 = vadd.f32 %v229, %v243
  %v279 = vadd.f32 %v278, %v257
  %v280 = vadd.f32 %v279, %v271
  %281 = vadd.xlane.f32.xlu0 %v280
  %v282 = vpop.xlane.xlu0 %281
  %v283 = vrcp.pop 512.0
  %v284 = vmul.f32 512.0, %v283
  %v285 = vsub.f32 1.0, %v284
  %v286 = vmul.f32 %v283, %v285
  %v287 = vadd.f32 %v283, %v286
  %vm288 = vweird.f32 %v283
  %v289 = vsel %vm288, %v283, %v287
  %v290 = vmul.f32 %v277, %v289
  %v291 = vmul.f32 %v282, %v289
  %v292 = vsub.f32 %v227, %v290
  %v293 = vsub.f32 %v241, %v290
  %v294 = vsub.f32 %v255, %v290
  %v295 = vsub.f32 %v269, %v290
  %v296 = vsub.f32 %v229, %v291
  %v297 = vsub.f32 %v243, %v291
  %v298 = vsub.f32 %v257, %v291
  %v299 = vsub.f32 %v271, %v291
  %v300 = vmul.f32 %v292, %v292
  %v301 = vmul.f32 %v293, %v293
  %v302 = vmul.f32 %v294, %v294
  %v303 = vmul.f32 %v295, %v295
  %v304 = vmul.f32 %v296, %v296
  %v305 = vmul.f32 %v297, %v297
  %v306 = vmul.f32 %v298, %v298
  %v307 = vmul.f32 %v299, %v299
  %v308 = vadd.f32 %v300, %v301
  %v309 = vadd.f32 %v308, %v302
  %v310 = vadd.f32 %v309, %v303
  %311 = vadd.xlane.f32.xlu0 %v310
  %v312 = vpop.xlane.xlu0 %311
  %v313 = vadd.f32 %v304, %v305
  %v314 = vadd.f32 %v313, %v306
  %v315 = vadd.f32 %v314, %v307
  %316 = vadd.xlane.f32.xlu0 %v315
  %v317 = vpop.xlane.xlu0 %316
  %v318 = vmul.f32 %v312, %v289
  %v319 = vmul.f32 %v317, %v289
  %v320 = vadd.f32 %v318, 1e-05
  %v321 = vadd.f32 %v319, 1e-05
  %v322 = vrsqrt.pop %v320
  %v323 = vmul.f32 %v322, %v320
  %v324 = vmul.f32 %v323, %v322
  %v325 = vmul.f32 0.5, %v324
  %v326 = vsub.f32 1.5, %v325
  %v327 = vmul.f32 %v322, %v326
  %vm328 = vweird.f32 %v320
  %vm329 = vweird.f32 %v322
  %vm330 = vmor %vm328, %vm329
  %v331 = vsel %vm330, %v322, %v327
  %v332 = vrsqrt.pop %v321
  %v333 = vmul.f32 %v332, %v321
  %v334 = vmul.f32 %v333, %v332
  %v335 = vmul.f32 0.5, %v334
  %v336 = vsub.f32 1.5, %v335
  %v337 = vmul.f32 %v332, %v336
  %vm338 = vweird.f32 %v321
  %vm339 = vweird.f32 %v332
  %vm340 = vmor %vm338, %vm339
  %v341 = vsel %vm340, %v332, %v337
  %v342 = vmul.f32 %v292, %v331
  %v343 = vmul.f32 %v293, %v331
  %v344 = vmul.f32 %v294, %v331
  %v345 = vmul.f32 %v295, %v331
  %v346 = vmul.f32 %v296, %v341
  %v347 = vmul.f32 %v297, %v341
  %v348 = vmul.f32 %v298, %v341
  %v349 = vmul.f32 %v299, %v341
  %v350 = vld [vmem:[%s2] sm:$0xff]
  %v351 = vld [vmem:[%s2 + $0x8] sm:$0xff]
  %353 = vset.pattern.permute.xlu0 0
  %354 = vperm.xlu0 %353, %v350
  %v355 = vpop.permute.xlu0 %354
  %358 = vset.pattern.permute.xlu0 0
  %359 = vperm.xlu0 %358, %v351
  %v360 = vpop.permute.xlu0 %359
  %v362 = vmul.f32 %v342, %v355
  %v363 = vmul.f32 %v343, %v355
  %v364 = vmul.f32 %v344, %v355
  %v365 = vmul.f32 %v345, %v355
  %v366 = vmul.f32 %v346, %v360
  %v367 = vmul.f32 %v347, %v360
  %v368 = vmul.f32 %v348, %v360
  %v369 = vmul.f32 %v349, %v360
  %v370 = vld [vmem:[%s3] sm:$0xff]
  %v371 = vld [vmem:[%s3 + $0x8] sm:$0xff]
  %373 = vset.pattern.permute.xlu0 0
  %374 = vperm.xlu0 %373, %v370
  %v375 = vpop.permute.xlu0 %374
  %378 = vset.pattern.permute.xlu0 0
  %379 = vperm.xlu0 %378, %v371
  %v380 = vpop.permute.xlu0 %379
  %v382 = vadd.f32 %v362, %v375
  %v383 = vadd.f32 %v363, %v375
  %v384 = vadd.f32 %v364, %v375
  %v385 = vadd.f32 %v365, %v375
  %v386 = vadd.f32 %v366, %v380
  %v387 = vadd.f32 %v367, %v380
  %v388 = vadd.f32 %v368, %v380
  %v389 = vadd.f32 %v369, %v380
  %vm390 = vcmp.gt.f32.partialorder %v382, 0.0
  %vm391 = vcmp.gt.f32.partialorder %v383, 0.0
  %vm392 = vcmp.gt.f32.partialorder %v384, 0.0
  %vm393 = vcmp.gt.f32.partialorder %v385, 0.0
  %vm394 = vcmp.gt.f32.partialorder %v386, 0.0
  %vm395 = vcmp.gt.f32.partialorder %v387, 0.0
  %vm396 = vcmp.gt.f32.partialorder %v388, 0.0
  %vm397 = vcmp.gt.f32.partialorder %v389, 0.0
  %v398 = vmul.f32 %v382, 0.2
  %v399 = vmul.f32 %v383, 0.2
  %v400 = vmul.f32 %v384, 0.2
  %v401 = vmul.f32 %v385, 0.2
  %v402 = vmul.f32 %v386, 0.2
  %v403 = vmul.f32 %v387, 0.2
  %v404 = vmul.f32 %v388, 0.2
  %v405 = vmul.f32 %v389, 0.2
  %v406 = vsel %vm390, %v382, %v398
  %v407 = vsel %vm391, %v383, %v399
  %v408 = vsel %vm392, %v384, %v400
  %v409 = vsel %vm393, %v385, %v401
  %v410 = vsel %vm394, %v386, %v402
  %v411 = vsel %vm395, %v387, %v403
  %v412 = vsel %vm396, %v388, %v404
  %v413 = vsel %vm397, %v389, %v405
  %v414 = vpack.c.bf16 %v407, %v406
  %v415 = vpack.c.bf16 %v409, %v408
  %v416 = vpack.c.bf16 %v411, %v410
  %v417 = vpack.c.bf16 %v413, %v412
  %418 = vst [vmem:[%s4] sm:$0xff] %v414
  %419 = vst [vmem:[%s4 + $0x8] sm:$0xff] %v415
  %420 = vst [vmem:[%s4 + $0x10] sm:$0xff] %v416
  %421 = vst [vmem:[%s4 + $0x18] sm:$0xff] %v417
  // Predicated region
  $region18: #{discriminator_forward.5} parent=0 // pred_check
    _
  $region19: #{discriminator_forward.5} parent=0 // pred_check_branch
    %423 = sbr.rel (0) target = $region21
  $region20: #{discriminator_forward.5} parent=0 // pred_region
    _
  $region21: #{discriminator_forward.5} parent=0 // pred_fallthru
    _
  // Predicated region
  $region22: #{discriminator_forward.5} parent=0 // pred_check
    _
  $region23: #{discriminator_forward.5} parent=0 // pred_check_branch
    %425 = sbr.rel (0) target = $region25
  $region24: #{discriminator_forward.5} parent=0 // pred_region
    _
  $region25: #{discriminator_forward.5} parent=0 // pred_fallthru
    _

// kernel: discriminator_forward.6
$region0: #{discriminator_forward.6}
  #allocation0 [shape = 'u32[]', space=smem, size = 0x4, offset = 0x4, fixed_abs, tag = 'smem constant byte address 0x4 - core index']
  #allocation1 [shape = 'u32[72,128]{1,0:T(1,128)}', space=vmem, size = 0x9000, scoped, tag = 'internal scratch']
  %s0 = inlined_call_operand.vmem [shape: bf16[256,128], index: 0, kind: input, shape index: {}]
  %s1 = inlined_call_operand.vmem [shape: bf16[32,256], index: 1, kind: input, shape index: {}]
  %s2 = inlined_call_operand.vmem [shape: f32[32,1], index: 2, kind: input, shape index: {}]
  %s3 = inlined_call_operand.vmem [shape: f32[32,1], index: 3, kind: input, shape index: {}]
  %s4 = inlined_call_operand.vmem [shape: bf16[32,128], index: 4, kind: output, shape index: {}]
  %s5 = sld [smem:[#allocation0]]
  $region26: #{discriminator_forward.6} parent=0
    _
  %s7 = ssub.s32 1, %s5
  %s8 = scalar_select 0, %s7, %s5
  // Predicated region
  $region2: #{discriminator_forward.6} parent=0 // pred_check
    _
  $region3: #{discriminator_forward.6} parent=0 // pred_check_branch
    %10 = sbr.rel (0) target = $region5
  $region4: #{discriminator_forward.6} parent=0 // pred_region
    _
  $region5: #{discriminator_forward.6} parent=0 // pred_fallthru
    _
  // Predicated region
  $region6: #{discriminator_forward.6} parent=0 // pred_check
    _
  $region7: #{discriminator_forward.6} parent=0 // pred_check_branch
    %12 = sbr.rel (0) target = $region9
  $region8: #{discriminator_forward.6} parent=0 // pred_region
    _
  $region9: #{discriminator_forward.6} parent=0 // pred_fallthru
    _
  // Predicated region
  $region10: #{discriminator_forward.6} parent=0 // pred_check
    _
  $region11: #{discriminator_forward.6} parent=0 // pred_check_branch
    %14 = sbr.rel (0) target = $region13
  $region12: #{discriminator_forward.6} parent=0 // pred_region
    _
  $region13: #{discriminator_forward.6} parent=0 // pred_fallthru
    _
  // Predicated region
  $region14: #{discriminator_forward.6} parent=0 // pred_check
    _
  $region15: #{discriminator_forward.6} parent=0 // pred_check_branch
    %16 = sbr.rel (0) target = $region17
  $region16: #{discriminator_forward.6} parent=0 // pred_region
    _
  $region17: #{discriminator_forward.6} parent=0 // pred_fallthru
    _
  %v17 = vld [vmem:[%s1] sm:$0xff]
  %v18 = vld [vmem:[%s1 + $0x8] sm:$0xff]
  %v19 = vld [vmem:[%s1 + $0x10] sm:$0xff]
  %v20 = vld [vmem:[%s1 + $0x18] sm:$0xff]
  %v21 = vld [vmem:[%s0] sm:$0xf]
  %v22 = vld [vmem:[%s0 + $0x4] sm:$0xf]
  %v23 = vld [vmem:[%s0 + $0x8] sm:$0xf]
  %v24 = vld [vmem:[%s0 + $0xc] sm:$0xf]
  %v25 = vld [vmem:[%s0 + $0x10] sm:$0xf]
  %v26 = vld [vmem:[%s0 + $0x14] sm:$0xf]
  %v27 = vld [vmem:[%s0 + $0x18] sm:$0xf]
  %v28 = vld [vmem:[%s0 + $0x1c] sm:$0xf]
  %v29 = vld [vmem:[%s0 + $0x20] sm:$0xf]
  %v30 = vld [vmem:[%s0 + $0x24] sm:$0xf]
  %v31 = vld [vmem:[%s0 + $0x28] sm:$0xf]
  %v32 = vld [vmem:[%s0 + $0x2c] sm:$0xf]
  %v33 = vld [vmem:[%s0 + $0x30] sm:$0xf]
  %v34 = vld [vmem:[%s0 + $0x34] sm:$0xf]
  %v35 = vld [vmem:[%s0 + $0x38] sm:$0xf]
  %v36 = vld [vmem:[%s0 + $0x3c] sm:$0xf]
  %v37 = vld [vmem:[%s0 + $0x40] sm:$0xf]
  %v38 = vld [vmem:[%s0 + $0x44] sm:$0xf]
  %v39 = vld [vmem:[%s0 + $0x48] sm:$0xf]
  %v40 = vld [vmem:[%s0 + $0x4c] sm:$0xf]
  %v41 = vld [vmem:[%s0 + $0x50] sm:$0xf]
  %v42 = vld [vmem:[%s0 + $0x54] sm:$0xf]
  %v43 = vld [vmem:[%s0 + $0x58] sm:$0xf]
  %v44 = vld [vmem:[%s0 + $0x5c] sm:$0xf]
  %v45 = vld [vmem:[%s0 + $0x60] sm:$0xf]
  %v46 = vld [vmem:[%s0 + $0x64] sm:$0xf]
  %v47 = vld [vmem:[%s0 + $0x68] sm:$0xf]
  %v48 = vld [vmem:[%s0 + $0x6c] sm:$0xf]
  %v49 = vld [vmem:[%s0 + $0x70] sm:$0xf]
  %v50 = vld [vmem:[%s0 + $0x74] sm:$0xf]
  %v51 = vld [vmem:[%s0 + $0x78] sm:$0xf]
  %v52 = vld [vmem:[%s0 + $0x7c] sm:$0xf]
  %v57 = vunpack.c.l.b16 %v17
  %v58 = vunpack.c.h.b16 %v17
  %v59 = vunpack.c.l.b16 %v18
  %v60 = vunpack.c.h.b16 %v18
  %v61 = vunpack.c.l.b16 %v19
  %v62 = vunpack.c.h.b16 %v19
  %v63 = vunpack.c.l.b16 %v20
  %v64 = vunpack.c.h.b16 %v20
  %v65 = vpack.c.b16 %v59, %v57
  %v66 = vpack.c.b16 %v60, %v58
  %v67 = vpack.c.b16 %v63, %v61
  %v68 = vpack.c.b16 %v64, %v62
  %v105 = vunpack.c.l.b16 %v21
  %v106 = vunpack.c.l.b16 %v22
  %v107 = vunpack.c.l.b16 %v23
  %v108 = vunpack.c.l.b16 %v24
  %v109 = vunpack.c.l.b16 %v25
  %v110 = vunpack.c.l.b16 %v26
  %v111 = vunpack.c.l.b16 %v27
  %v112 = vunpack.c.l.b16 %v28
  %v113 = vunpack.c.l.b16 %v29
  %v114 = vunpack.c.l.b16 %v30
  %v115 = vunpack.c.l.b16 %v31
  %v116 = vunpack.c.l.b16 %v32
  %v117 = vunpack.c.l.b16 %v33
  %v118 = vunpack.c.l.b16 %v34
  %v119 = vunpack.c.l.b16 %v35
  %v120 = vunpack.c.l.b16 %v36
  %v121 = vunpack.c.l.b16 %v37
  %v122 = vunpack.c.l.b16 %v38
  %v123 = vunpack.c.l.b16 %v39
  %v124 = vunpack.c.l.b16 %v40
  %v125 = vunpack.c.l.b16 %v41
  %v126 = vunpack.c.l.b16 %v42
  %v127 = vunpack.c.l.b16 %v43
  %v128 = vunpack.c.l.b16 %v44
  %v129 = vunpack.c.l.b16 %v45
  %v130 = vunpack.c.l.b16 %v46
  %v131 = vunpack.c.l.b16 %v47
  %v132 = vunpack.c.l.b16 %v48
  %v133 = vunpack.c.l.b16 %v49
  %v134 = vunpack.c.l.b16 %v50
  %v135 = vunpack.c.l.b16 %v51
  %v136 = vunpack.c.l.b16 %v52
  %v137 = vpack.c.b16 %v106, %v105
  %v138 = vpack.c.b16 %v108, %v107
  %v139 = vpack.c.b16 %v110, %v109
  %v140 = vpack.c.b16 %v112, %v111
  %v141 = vpack.c.b16 %v114, %v113
  %v142 = vpack.c.b16 %v116, %v115
  %v143 = vpack.c.b16 %v118, %v117
  %v144 = vpack.c.b16 %v120, %v119
  %v145 = vpack.c.b16 %v122, %v121
  %v146 = vpack.c.b16 %v124, %v123
  %v147 = vpack.c.b16 %v126, %v125
  %v148 = vpack.c.b16 %v128, %v127
  %v149 = vpack.c.b16 %v130, %v129
  %v150 = vpack.c.b16 %v132, %v131
  %v151 = vpack.c.b16 %v134, %v133
  %v152 = vpack.c.b16 %v136, %v135
  %169 = vmatpush.bf16.msra.mxu0 %v144
  %170 = vmatpush.bf16.msra.mxu0 %v143
  %171 = vmatpush.bf16.msra.mxu0 %v142
  %172 = vmatpush.bf16.msra.mxu0 %v141
  %173 = vmatpush.bf16.msra.mxu0 %v140
  %174 = vmatpush.bf16.msra.mxu0 %v139
  %175 = vmatpush.bf16.msra.mxu0 %v138
  %176 = vmatpush.bf16.msra.mxu0 %v137
  %177 = vmatmul.bf16.gmra.mxu0 %v65
  %v178 = vpop.f32.mrf.mxu0
  %v179 = vadd.f32 0.0, %v178
  %v180 = vpop.f32.mrf.mxu0
  %v181 = vadd.f32 0.0, %v180
  %182 = vmatmul.bf16.gmra.mxu0 %v67
  %v183 = vpop.f32.mrf.mxu0
  %v184 = vadd.f32 0.0, %v183
  %v185 = vpop.f32.mrf.mxu0
  %v186 = vadd.f32 0.0, %v185
  %187 = vdwg.mxu0
  %188 = vmatpush.bf16.msra.mxu0 %v152
  %189 = vmatpush.bf16.msra.mxu0 %v151
  %190 = vmatpush.bf16.msra.mxu0 %v150
  %191 = vmatpush.bf16.msra.mxu0 %v149
  %192 = vmatpush.bf16.msra.mxu0 %v148
  %193 = vmatpush.bf16.msra.mxu0 %v147
  %194 = vmatpush.bf16.msra.mxu0 %v146
  %195 = vmatpush.bf16.msra.mxu0 %v145
  %196 = vmatmul.bf16.gmra.mxu0 %v66
  %v197 = vpop.f32.mrf.mxu0
  %v198 = vadd.f32 %v179, %v197
  %v199 = vpop.f32.mrf.mxu0
  %v200 = vadd.f32 %v181, %v199
  %201 = vmatmul.bf16.gmra.mxu0 %v68
  %v202 = vpop.f32.mrf.mxu0
  %v203 = vadd.f32 %v184, %v202
  %v204 = vpop.f32.mrf.mxu0
  %v205 = vadd.f32 %v186, %v204
  %206 = vdwg.mxu0
  %207 = vadd.xlane.f32.xlu0 %v198
  %v208 = vpop.xlane.xlu0 %207
  %209 = vadd.xlane.f32.xlu0 %v200
  %v210 = vpop.xlane.xlu0 %209
  %211 = vadd.xlane.f32.xlu0 %v203
  %v212 = vpop.xlane.xlu0 %211
  %213 = vadd.xlane.f32.xlu0 %v205
  %v214 = vpop.xlane.xlu0 %213
  %v215 = vrcp.pop 128.0
  %v216 = vmul.f32 128.0, %v215
  %v217 = vsub.f32 1.0, %v216
  %v218 = vmul.f32 %v215, %v217
  %v219 = vadd.f32 %v215, %v218
  %vm220 = vweird.f32 %v215
  %v221 = vsel %vm220, %v215, %v219
  %v222 = vmul.f32 %v208, %v221
  %v223 = vmul.f32 %v210, %v221
  %v224 = vmul.f32 %v212, %v221
  %v225 = vmul.f32 %v214, %v221
  %v226 = vsub.f32 %v198, %v222
  %v227 = vsub.f32 %v200, %v223
  %v228 = vsub.f32 %v203, %v224
  %v229 = vsub.f32 %v205, %v225
  %v230 = vmul.f32 %v226, %v226
  %v231 = vmul.f32 %v227, %v227
  %v232 = vmul.f32 %v228, %v228
  %v233 = vmul.f32 %v229, %v229
  %234 = vadd.xlane.f32.xlu0 %v230
  %v235 = vpop.xlane.xlu0 %234
  %236 = vadd.xlane.f32.xlu0 %v231
  %v237 = vpop.xlane.xlu0 %236
  %238 = vadd.xlane.f32.xlu0 %v232
  %v239 = vpop.xlane.xlu0 %238
  %240 = vadd.xlane.f32.xlu0 %v233
  %v241 = vpop.xlane.xlu0 %240
  %v242 = vmul.f32 %v235, %v221
  %v243 = vmul.f32 %v237, %v221
  %v244 = vmul.f32 %v239, %v221
  %v245 = vmul.f32 %v241, %v221
  %v246 = vadd.f32 %v242, 1e-05
  %v247 = vadd.f32 %v243, 1e-05
  %v248 = vadd.f32 %v244, 1e-05
  %v249 = vadd.f32 %v245, 1e-05
  %v250 = vrsqrt.pop %v246
  %v251 = vmul.f32 %v250, %v246
  %v252 = vmul.f32 %v251, %v250
  %v253 = vmul.f32 0.5, %v252
  %v254 = vsub.f32 1.5, %v253
  %v255 = vmul.f32 %v250, %v254
  %vm256 = vweird.f32 %v246
  %vm257 = vweird.f32 %v250
  %vm258 = vmor %vm256, %vm257
  %v259 = vsel %vm258, %v250, %v255
  %v260 = vrsqrt.pop %v247
  %v261 = vmul.f32 %v260, %v247
  %v262 = vmul.f32 %v261, %v260
  %v263 = vmul.f32 0.5, %v262
  %v264 = vsub.f32 1.5, %v263
  %v265 = vmul.f32 %v260, %v264
  %vm266 = vweird.f32 %v247
  %vm267 = vweird.f32 %v260
  %vm268 = vmor %vm266, %vm267
  %v269 = vsel %vm268, %v260, %v265
  %v270 = vrsqrt.pop %v248
  %v271 = vmul.f32 %v270, %v248
  %v272 = vmul.f32 %v271, %v270
  %v273 = vmul.f32 0.5, %v272
  %v274 = vsub.f32 1.5, %v273
  %v275 = vmul.f32 %v270, %v274
  %vm276 = vweird.f32 %v248
  %vm277 = vweird.f32 %v270
  %vm278 = vmor %vm276, %vm277
  %v279 = vsel %vm278, %v270, %v275
  %v280 = vrsqrt.pop %v249
  %v281 = vmul.f32 %v280, %v249
  %v282 = vmul.f32 %v281, %v280
  %v283 = vmul.f32 0.5, %v282
  %v284 = vsub.f32 1.5, %v283
  %v285 = vmul.f32 %v280, %v284
  %vm286 = vweird.f32 %v249
  %vm287 = vweird.f32 %v280
  %vm288 = vmor %vm286, %vm287
  %v289 = vsel %vm288, %v280, %v285
  %v290 = vmul.f32 %v226, %v259
  %v291 = vmul.f32 %v227, %v269
  %v292 = vmul.f32 %v228, %v279
  %v293 = vmul.f32 %v229, %v289
  %v294 = vld [vmem:[%s2] sm:$0xff]
  %v295 = vld [vmem:[%s2 + $0x8] sm:$0xff]
  %v296 = vld [vmem:[%s2 + $0x10] sm:$0xff]
  %v297 = vld [vmem:[%s2 + $0x18] sm:$0xff]
  %299 = vset.pattern.permute.xlu0 0
  %300 = vperm.xlu0 %299, %v294
  %v301 = vpop.permute.xlu0 %300
  %304 = vset.pattern.permute.xlu0 0
  %305 = vperm.xlu0 %304, %v295
  %v306 = vpop.permute.xlu0 %305
  %309 = vset.pattern.permute.xlu0 0
  %310 = vperm.xlu0 %309, %v296
  %v311 = vpop.permute.xlu0 %310
  %314 = vset.pattern.permute.xlu0 0
  %315 = vperm.xlu0 %314, %v297
  %v316 = vpop.permute.xlu0 %315
  %v318 = vmul.f32 %v290, %v301
  %v319 = vmul.f32 %v291, %v306
  %v320 = vmul.f32 %v292, %v311
  %v321 = vmul.f32 %v293, %v316
  %v322 = vld [vmem:[%s3] sm:$0xff]
  %v323 = vld [vmem:[%s3 + $0x8] sm:$0xff]
  %v324 = vld [vmem:[%s3 + $0x10] sm:$0xff]
  %v325 = vld [vmem:[%s3 + $0x18] sm:$0xff]
  %327 = vset.pattern.permute.xlu0 0
  %328 = vperm.xlu0 %327, %v322
  %v329 = vpop.permute.xlu0 %328
  %332 = vset.pattern.permute.xlu0 0
  %333 = vperm.xlu0 %332, %v323
  %v334 = vpop.permute.xlu0 %333
  %337 = vset.pattern.permute.xlu0 0
  %338 = vperm.xlu0 %337, %v324
  %v339 = vpop.permute.xlu0 %338
  %342 = vset.pattern.permute.xlu0 0
  %343 = vperm.xlu0 %342, %v325
  %v344 = vpop.permute.xlu0 %343
  %v346 = vadd.f32 %v318, %v329
  %v347 = vadd.f32 %v319, %v334
  %v348 = vadd.f32 %v320, %v339
  %v349 = vadd.f32 %v321, %v344
  %vm350 = vcmp.gt.f32.partialorder %v346, 0.0
  %vm351 = vcmp.gt.f32.partialorder %v347, 0.0
  %vm352 = vcmp.gt.f32.partialorder %v348, 0.0
  %vm353 = vcmp.gt.f32.partialorder %v349, 0.0
  %v354 = vmul.f32 %v346, 0.2
  %v355 = vmul.f32 %v347, 0.2
  %v356 = vmul.f32 %v348, 0.2
  %v357 = vmul.f32 %v349, 0.2
  %v358 = vsel %vm350, %v346, %v354
  %v359 = vsel %vm351, %v347, %v355
  %v360 = vsel %vm352, %v348, %v356
  %v361 = vsel %vm353, %v349, %v357
  %v362 = vpack.c.bf16 %v358, %v358
  %v363 = vpack.c.bf16 %v359, %v359
  %v364 = vpack.c.bf16 %v360, %v360
  %v365 = vpack.c.bf16 %v361, %v361
  %366 = vst [vmem:[%s4] sm:$0xf] %v362
  %367 = vst [vmem:[%s4 + $0x4] sm:$0xf] %v363
  %368 = vst [vmem:[%s4 + $0x8] sm:$0xf] %v364
  %369 = vst [vmem:[%s4 + $0xc] sm:$0xf] %v365
  // Predicated region
  $region18: #{discriminator_forward.6} parent=0 // pred_check
    _
  $region19: #{discriminator_forward.6} parent=0 // pred_check_branch
    %371 = sbr.rel (0) target = $region21
  $region20: #{discriminator_forward.6} parent=0 // pred_region
    _
  $region21: #{discriminator_forward.6} parent=0 // pred_fallthru
    _
  // Predicated region
  $region22: #{discriminator_forward.6} parent=0 // pred_check
    _
  $region23: #{discriminator_forward.6} parent=0 // pred_check_branch
    %373 = sbr.rel (0) target = $region25
  $region24: #{discriminator_forward.6} parent=0 // pred_region
    _
  $region25: #{discriminator_forward.6} parent=0 // pred_fallthru
    _

// kernel: discriminator_forward.7
$region0: #{discriminator_forward.7}
  #allocation0 [shape = 'u32[]', space=smem, size = 0x4, offset = 0x4, fixed_abs, tag = 'smem constant byte address 0x4 - core index']
  #allocation1 [shape = 'u32[72,128]{1,0:T(1,128)}', space=vmem, size = 0x9000, scoped, tag = 'internal scratch']
  %s0 = inlined_call_operand.vmem [shape: bf16[512,32], index: 0, kind: input, shape index: {}]
  %s1 = inlined_call_operand.vmem [shape: bf16[64,512], index: 1, kind: input, shape index: {}]
  %s2 = inlined_call_operand.vmem [shape: f32[64,1], index: 2, kind: input, shape index: {}]
  %s3 = inlined_call_operand.vmem [shape: f32[64,1], index: 3, kind: input, shape index: {}]
  %s4 = inlined_call_operand.vmem [shape: f32[64,32], index: 4, kind: input, shape index: {}]
  %s5 = inlined_call_operand.vmem [shape: f32[32,128], index: 5, kind: input, shape index: {}]
  %s6 = inlined_call_operand.vmem [shape: f32[1,128], index: 6, kind: output, shape index: {}]
  %s7 = sld [smem:[#allocation0]]
  $region34: #{discriminator_forward.7} parent=0
    _
  %s9 = ssub.s32 1, %s7
  %s10 = scalar_select 0, %s9, %s7
  // Predicated region
  $region2: #{discriminator_forward.7} parent=0 // pred_check
    _
  $region3: #{discriminator_forward.7} parent=0 // pred_check_branch
    %12 = sbr.rel (0) target = $region5
  $region4: #{discriminator_forward.7} parent=0 // pred_region
    _
  $region5: #{discriminator_forward.7} parent=0 // pred_fallthru
    _
  // Predicated region
  $region6: #{discriminator_forward.7} parent=0 // pred_check
    _
  $region7: #{discriminator_forward.7} parent=0 // pred_check_branch
    %14 = sbr.rel (0) target = $region9
  $region8: #{discriminator_forward.7} parent=0 // pred_region
    _
  $region9: #{discriminator_forward.7} parent=0 // pred_fallthru
    _
  // Predicated region
  $region10: #{discriminator_forward.7} parent=0 // pred_check
    _
  $region11: #{discriminator_forward.7} parent=0 // pred_check_branch
    %16 = sbr.rel (0) target = $region13
  $region12: #{discriminator_forward.7} parent=0 // pred_region
    _
  $region13: #{discriminator_forward.7} parent=0 // pred_fallthru
    _
  // Predicated region
  $region14: #{discriminator_forward.7} parent=0 // pred_check
    _
  $region15: #{discriminator_forward.7} parent=0 // pred_check_branch
    %18 = sbr.rel (0) target = $region17
  $region16: #{discriminator_forward.7} parent=0 // pred_region
    _
  $region17: #{discriminator_forward.7} parent=0 // pred_fallthru
    _
  // Predicated region
  $region18: #{discriminator_forward.7} parent=0 // pred_check
    _
  $region19: #{discriminator_forward.7} parent=0 // pred_check_branch
    %20 = sbr.rel (0) target = $region21
  $region20: #{discriminator_forward.7} parent=0 // pred_region
    _
  $region21: #{discriminator_forward.7} parent=0 // pred_fallthru
    _
  // Predicated region
  $region22: #{discriminator_forward.7} parent=0 // pred_check
    _
  $region23: #{discriminator_forward.7} parent=0 // pred_check_branch
    %22 = sbr.rel (0) target = $region25
  $region24: #{discriminator_forward.7} parent=0 // pred_region
    _
  $region25: #{discriminator_forward.7} parent=0 // pred_fallthru
    _
  %v23 = vld [vmem:[%s1] sm:$0xff]
  %v24 = vld [vmem:[%s1 + $0x8] sm:$0xff]
  %v25 = vld [vmem:[%s1 + $0x10] sm:$0xff]
  %v26 = vld [vmem:[%s1 + $0x18] sm:$0xff]
  %v27 = vld [vmem:[%s1 + $0x20] sm:$0xff]
  %v28 = vld [vmem:[%s1 + $0x28] sm:$0xff]
  %v29 = vld [vmem:[%s1 + $0x30] sm:$0xff]
  %v30 = vld [vmem:[%s1 + $0x38] sm:$0xff]
  %v31 = vld [vmem:[%s1 + $0x40] sm:$0xff]
  %v32 = vld [vmem:[%s1 + $0x48] sm:$0xff]
  %v33 = vld [vmem:[%s1 + $0x50] sm:$0xff]
  %v34 = vld [vmem:[%s1 + $0x58] sm:$0xff]
  %v35 = vld [vmem:[%s1 + $0x60] sm:$0xff]
  %v36 = vld [vmem:[%s1 + $0x68] sm:$0xff]
  %v37 = vld [vmem:[%s1 + $0x70] sm:$0xff]
  %v38 = vld [vmem:[%s1 + $0x78] sm:$0xff]
  %v39 = vld [vmem:[%s0] sm:$0xf]
  %v40 = vld [vmem:[%s0 + $0x4] sm:$0xf]
  %v41 = vld [vmem:[%s0 + $0x8] sm:$0xf]
  %v42 = vld [vmem:[%s0 + $0xc] sm:$0xf]
  %v43 = vld [vmem:[%s0 + $0x10] sm:$0xf]
  %v44 = vld [vmem:[%s0 + $0x14] sm:$0xf]
  %v45 = vld [vmem:[%s0 + $0x18] sm:$0xf]
  %v46 = vld [vmem:[%s0 + $0x1c] sm:$0xf]
  %v47 = vld [vmem:[%s0 + $0x20] sm:$0xf]
  %v48 = vld [vmem:[%s0 + $0x24] sm:$0xf]
  %v49 = vld [vmem:[%s0 + $0x28] sm:$0xf]
  %v50 = vld [vmem:[%s0 + $0x2c] sm:$0xf]
  %v51 = vld [vmem:[%s0 + $0x30] sm:$0xf]
  %v52 = vld [vmem:[%s0 + $0x34] sm:$0xf]
  %v53 = vld [vmem:[%s0 + $0x38] sm:$0xf]
  %v54 = vld [vmem:[%s0 + $0x3c] sm:$0xf]
  %v55 = vld [vmem:[%s0 + $0x40] sm:$0xf]
  %v56 = vld [vmem:[%s0 + $0x44] sm:$0xf]
  %v57 = vld [vmem:[%s0 + $0x48] sm:$0xf]
  %v58 = vld [vmem:[%s0 + $0x4c] sm:$0xf]
  %v59 = vld [vmem:[%s0 + $0x50] sm:$0xf]
  %v60 = vld [vmem:[%s0 + $0x54] sm:$0xf]
  %v61 = vld [vmem:[%s0 + $0x58] sm:$0xf]
  %v62 = vld [vmem:[%s0 + $0x5c] sm:$0xf]
  %v63 = vld [vmem:[%s0 + $0x60] sm:$0xf]
  %v64 = vld [vmem:[%s0 + $0x64] sm:$0xf]
  %v65 = vld [vmem:[%s0 + $0x68] sm:$0xf]
  %v66 = vld [vmem:[%s0 + $0x6c] sm:$0xf]
  %v67 = vld [vmem:[%s0 + $0x70] sm:$0xf]
  %v68 = vld [vmem:[%s0 + $0x74] sm:$0xf]
  %v69 = vld [vmem:[%s0 + $0x78] sm:$0xf]
  %v70 = vld [vmem:[%s0 + $0x7c] sm:$0xf]
  %v71 = vld [vmem:[%s0 + $0x80] sm:$0xf]
  %v72 = vld [vmem:[%s0 + $0x84] sm:$0xf]
  %v73 = vld [vmem:[%s0 + $0x88] sm:$0xf]
  %v74 = vld [vmem:[%s0 + $0x8c] sm:$0xf]
  %v75 = vld [vmem:[%s0 + $0x90] sm:$0xf]
  %v76 = vld [vmem:[%s0 + $0x94] sm:$0xf]
  %v77 = vld [vmem:[%s0 + $0x98] sm:$0xf]
  %v78 = vld [vmem:[%s0 + $0x9c] sm:$0xf]
  %v79 = vld [vmem:[%s0 + $0xa0] sm:$0xf]
  %v80 = vld [vmem:[%s0 + $0xa4] sm:$0xf]
  %v81 = vld [vmem:[%s0 + $0xa8] sm:$0xf]
  %v82 = vld [vmem:[%s0 + $0xac] sm:$0xf]
  %v83 = vld [vmem:[%s0 + $0xb0] sm:$0xf]
  %v84 = vld [vmem:[%s0 + $0xb4] sm:$0xf]
  %v85 = vld [vmem:[%s0 + $0xb8] sm:$0xf]
  %v86 = vld [vmem:[%s0 + $0xbc] sm:$0xf]
  %v87 = vld [vmem:[%s0 + $0xc0] sm:$0xf]
  %v88 = vld [vmem:[%s0 + $0xc4] sm:$0xf]
  %v89 = vld [vmem:[%s0 + $0xc8] sm:$0xf]
  %v90 = vld [vmem:[%s0 + $0xcc] sm:$0xf]
  %v91 = vld [vmem:[%s0 + $0xd0] sm:$0xf]
  %v92 = vld [vmem:[%s0 + $0xd4] sm:$0xf]
  %v93 = vld [vmem:[%s0 + $0xd8] sm:$0xf]
  %v94 = vld [vmem:[%s0 + $0xdc] sm:$0xf]
  %v95 = vld [vmem:[%s0 + $0xe0] sm:$0xf]
  %v96 = vld [vmem:[%s0 + $0xe4] sm:$0xf]
  %v97 = vld [vmem:[%s0 + $0xe8] sm:$0xf]
  %v98 = vld [vmem:[%s0 + $0xec] sm:$0xf]
  %v99 = vld [vmem:[%s0 + $0xf0] sm:$0xf]
  %v100 = vld [vmem:[%s0 + $0xf4] sm:$0xf]
  %v101 = vld [vmem:[%s0 + $0xf8] sm:$0xf]
  %v102 = vld [vmem:[%s0 + $0xfc] sm:$0xf]
  %v119 = vunpack.c.l.b16 %v23
  %v120 = vunpack.c.h.b16 %v23
  %v121 = vunpack.c.l.b16 %v24
  %v122 = vunpack.c.h.b16 %v24
  %v123 = vunpack.c.l.b16 %v25
  %v124 = vunpack.c.h.b16 %v25
  %v125 = vunpack.c.l.b16 %v26
  %v126 = vunpack.c.h.b16 %v26
  %v127 = vunpack.c.l.b16 %v27
  %v128 = vunpack.c.h.b16 %v27
  %v129 = vunpack.c.l.b16 %v28
  %v130 = vunpack.c.h.b16 %v28
  %v131 = vunpack.c.l.b16 %v29
  %v132 = vunpack.c.h.b16 %v29
  %v133 = vunpack.c.l.b16 %v30
  %v134 = vunpack.c.h.b16 %v30
  %v135 = vunpack.c.l.b16 %v31
  %v136 = vunpack.c.h.b16 %v31
  %v137 = vunpack.c.l.b16 %v32
  %v138 = vunpack.c.h.b16 %v32
  %v139 = vunpack.c.l.b16 %v33
  %v140 = vunpack.c.h.b16 %v33
  %v141 = vunpack.c.l.b16 %v34
  %v142 = vunpack.c.h.b16 %v34
  %v143 = vunpack.c.l.b16 %v35
  %v144 = vunpack.c.h.b16 %v35
  %v145 = vunpack.c.l.b16 %v36
  %v146 = vunpack.c.h.b16 %v36
  %v147 = vunpack.c.l.b16 %v37
  %v148 = vunpack.c.h.b16 %v37
  %v149 = vunpack.c.l.b16 %v38
  %v150 = vunpack.c.h.b16 %v38
  %v151 = vpack.c.b16 %v123, %v119
  %v152 = vpack.c.b16 %v124, %v120
  %v153 = vpack.c.b16 %v125, %v121
  %v154 = vpack.c.b16 %v126, %v122
  %v155 = vpack.c.b16 %v131, %v127
  %v156 = vpack.c.b16 %v132, %v128
  %v157 = vpack.c.b16 %v133, %v129
  %v158 = vpack.c.b16 %v134, %v130
  %v159 = vpack.c.b16 %v139, %v135
  %v160 = vpack.c.b16 %v140, %v136
  %v161 = vpack.c.b16 %v141, %v137
  %v162 = vpack.c.b16 %v142, %v138
  %v163 = vpack.c.b16 %v147, %v143
  %v164 = vpack.c.b16 %v148, %v144
  %v165 = vpack.c.b16 %v149, %v145
  %v166 = vpack.c.b16 %v150, %v146
  %v247 = vunpack.c.l.b16 %v39
  %v248 = vunpack.c.l.b16 %v40
  %v249 = vunpack.c.l.b16 %v41
  %v250 = vunpack.c.l.b16 %v42
  %v251 = vunpack.c.l.b16 %v43
  %v252 = vunpack.c.l.b16 %v44
  %v253 = vunpack.c.l.b16 %v45
  %v254 = vunpack.c.l.b16 %v46
  %v255 = vunpack.c.l.b16 %v47
  %v256 = vunpack.c.l.b16 %v48
  %v257 = vunpack.c.l.b16 %v49
  %v258 = vunpack.c.l.b16 %v50
  %v259 = vunpack.c.l.b16 %v51
  %v260 = vunpack.c.l.b16 %v52
  %v261 = vunpack.c.l.b16 %v53
  %v262 = vunpack.c.l.b16 %v54
  %v263 = vunpack.c.l.b16 %v55
  %v264 = vunpack.c.l.b16 %v56
  %v265 = vunpack.c.l.b16 %v57
  %v266 = vunpack.c.l.b16 %v58
  %v267 = vunpack.c.l.b16 %v59
  %v268 = vunpack.c.l.b16 %v60
  %v269 = vunpack.c.l.b16 %v61
  %v270 = vunpack.c.l.b16 %v62
  %v271 = vunpack.c.l.b16 %v63
  %v272 = vunpack.c.l.b16 %v64
  %v273 = vunpack.c.l.b16 %v65
  %v274 = vunpack.c.l.b16 %v66
  %v275 = vunpack.c.l.b16 %v67
  %v276 = vunpack.c.l.b16 %v68
  %v277 = vunpack.c.l.b16 %v69
  %v278 = vunpack.c.l.b16 %v70
  %v279 = vunpack.c.l.b16 %v71
  %v280 = vunpack.c.l.b16 %v72
  %v281 = vunpack.c.l.b16 %v73
  %v282 = vunpack.c.l.b16 %v74
  %v283 = vunpack.c.l.b16 %v75
  %v284 = vunpack.c.l.b16 %v76
  %v285 = vunpack.c.l.b16 %v77
  %v286 = vunpack.c.l.b16 %v78
  %v287 = vunpack.c.l.b16 %v79
  %v288 = vunpack.c.l.b16 %v80
  %v289 = vunpack.c.l.b16 %v81
  %v290 = vunpack.c.l.b16 %v82
  %v291 = vunpack.c.l.b16 %v83
  %v292 = vunpack.c.l.b16 %v84
  %v293 = vunpack.c.l.b16 %v85
  %v294 = vunpack.c.l.b16 %v86
  %v295 = vunpack.c.l.b16 %v87
  %v296 = vunpack.c.l.b16 %v88
  %v297 = vunpack.c.l.b16 %v89
  %v298 = vunpack.c.l.b16 %v90
  %v299 = vunpack.c.l.b16 %v91
  %v300 = vunpack.c.l.b16 %v92
  %v301 = vunpack.c.l.b16 %v93
  %v302 = vunpack.c.l.b16 %v94
  %v303 = vunpack.c.l.b16 %v95
  %v304 = vunpack.c.l.b16 %v96
  %v305 = vunpack.c.l.b16 %v97
  %v306 = vunpack.c.l.b16 %v98
  %v307 = vunpack.c.l.b16 %v99
  %v308 = vunpack.c.l.b16 %v100
  %v309 = vunpack.c.l.b16 %v101
  %v310 = vunpack.c.l.b16 %v102
  %v311 = vpack.c.b16 %v248, %v247
  %v312 = vpack.c.b16 %v250, %v249
  %v313 = vpack.c.b16 %v252, %v251
  %v314 = vpack.c.b16 %v254, %v253
  %v315 = vpack.c.b16 %v256, %v255
  %v316 = vpack.c.b16 %v258, %v257
  %v317 = vpack.c.b16 %v260, %v259
  %v318 = vpack.c.b16 %v262, %v261
  %v319 = vpack.c.b16 %v264, %v263
  %v320 = vpack.c.b16 %v266, %v265
  %v321 = vpack.c.b16 %v268, %v267
  %v322 = vpack.c.b16 %v270, %v269
  %v323 = vpack.c.b16 %v272, %v271
  %v324 = vpack.c.b16 %v274, %v273
  %v325 = vpack.c.b16 %v276, %v275
  %v326 = vpack.c.b16 %v278, %v277
  %v327 = vpack.c.b16 %v280, %v279
  %v328 = vpack.c.b16 %v282, %v281
  %v329 = vpack.c.b16 %v284, %v283
  %v330 = vpack.c.b16 %v286, %v285
  %v331 = vpack.c.b16 %v288, %v287
  %v332 = vpack.c.b16 %v290, %v289
  %v333 = vpack.c.b16 %v292, %v291
  %v334 = vpack.c.b16 %v294, %v293
  %v335 = vpack.c.b16 %v296, %v295
  %v336 = vpack.c.b16 %v298, %v297
  %v337 = vpack.c.b16 %v300, %v299
  %v338 = vpack.c.b16 %v302, %v301
  %v339 = vpack.c.b16 %v304, %v303
  %v340 = vpack.c.b16 %v306, %v305
  %v341 = vpack.c.b16 %v308, %v307
  %v342 = vpack.c.b16 %v310, %v309
  %375 = vmatpush.bf16.msra.mxu0 %v318
  %376 = vmatpush.bf16.msra.mxu0 %v317
  %377 = vmatpush.bf16.msra.mxu0 %v316
  %378 = vmatpush.bf16.msra.mxu0 %v315
  %379 = vmatpush.bf16.msra.mxu0 %v314
  %380 = vmatpush.bf16.msra.mxu0 %v313
  %381 = vmatpush.bf16.msra.mxu0 %v312
  %382 = vmatpush.bf16.msra.mxu0 %v311
  %383 = vmatmul.bf16.gmra.mxu0 %v151
  %v384 = vpop.f32.mrf.mxu0
  %v385 = vadd.f32 0.0, %v384
  %v386 = vpop.f32.mrf.mxu0
  %v387 = vadd.f32 0.0, %v386
  %388 = vmatmul.bf16.gmra.mxu0 %v155
  %v389 = vpop.f32.mrf.mxu0
  %v390 = vadd.f32 0.0, %v389
  %v391 = vpop.f32.mrf.mxu0
  %v392 = vadd.f32 0.0, %v391
  %393 = vmatmul.bf16.gmra.mxu0 %v159
  %v394 = vpop.f32.mrf.mxu0
  %v395 = vadd.f32 0.0, %v394
  %v396 = vpop.f32.mrf.mxu0
  %v397 = vadd.f32 0.0, %v396
  %398 = vmatmul.bf16.gmra.mxu0 %v163
  %v399 = vpop.f32.mrf.mxu0
  %v400 = vadd.f32 0.0, %v399
  %v401 = vpop.f32.mrf.mxu0
  %v402 = vadd.f32 0.0, %v401
  %403 = vdwg.mxu0
  %404 = vmatpush.bf16.msra.mxu0 %v326
  %405 = vmatpush.bf16.msra.mxu0 %v325
  %406 = vmatpush.bf16.msra.mxu0 %v324
  %407 = vmatpush.bf16.msra.mxu0 %v323
  %408 = vmatpush.bf16.msra.mxu0 %v322
  %409 = vmatpush.bf16.msra.mxu0 %v321
  %410 = vmatpush.bf16.msra.mxu0 %v320
  %411 = vmatpush.bf16.msra.mxu0 %v319
  %412 = vmatmul.bf16.gmra.mxu0 %v152
  %v413 = vpop.f32.mrf.mxu0
  %v414 = vadd.f32 %v385, %v413
  %v415 = vpop.f32.mrf.mxu0
  %v416 = vadd.f32 %v387, %v415
  %417 = vmatmul.bf16.gmra.mxu0 %v156
  %v418 = vpop.f32.mrf.mxu0
  %v419 = vadd.f32 %v390, %v418
  %v420 = vpop.f32.mrf.mxu0
  %v421 = vadd.f32 %v392, %v420
  %422 = vmatmul.bf16.gmra.mxu0 %v160
  %v423 = vpop.f32.mrf.mxu0
  %v424 = vadd.f32 %v395, %v423
  %v425 = vpop.f32.mrf.mxu0
  %v426 = vadd.f32 %v397, %v425
  %427 = vmatmul.bf16.gmra.mxu0 %v164
  %v428 = vpop.f32.mrf.mxu0
  %v429 = vadd.f32 %v400, %v428
  %v430 = vpop.f32.mrf.mxu0
  %v431 = vadd.f32 %v402, %v430
  %432 = vdwg.mxu0
  %433 = vmatpush.bf16.msra.mxu0 %v334
  %434 = vmatpush.bf16.msra.mxu0 %v333
  %435 = vmatpush.bf16.msra.mxu0 %v332
  %436 = vmatpush.bf16.msra.mxu0 %v331
  %437 = vmatpush.bf16.msra.mxu0 %v330
  %438 = vmatpush.bf16.msra.mxu0 %v329
  %439 = vmatpush.bf16.msra.mxu0 %v328
  %440 = vmatpush.bf16.msra.mxu0 %v327
  %441 = vmatmul.bf16.gmra.mxu0 %v153
  %v442 = vpop.f32.mrf.mxu0
  %v443 = vadd.f32 %v414, %v442
  %v444 = vpop.f32.mrf.mxu0
  %v445 = vadd.f32 %v416, %v444
  %446 = vmatmul.bf16.gmra.mxu0 %v157
  %v447 = vpop.f32.mrf.mxu0
  %v448 = vadd.f32 %v419, %v447
  %v449 = vpop.f32.mrf.mxu0
  %v450 = vadd.f32 %v421, %v449
  %451 = vmatmul.bf16.gmra.mxu0 %v161
  %v452 = vpop.f32.mrf.mxu0
  %v453 = vadd.f32 %v424, %v452
  %v454 = vpop.f32.mrf.mxu0
  %v455 = vadd.f32 %v426, %v454
  %456 = vmatmul.bf16.gmra.mxu0 %v165
  %v457 = vpop.f32.mrf.mxu0
  %v458 = vadd.f32 %v429, %v457
  %v459 = vpop.f32.mrf.mxu0
  %v460 = vadd.f32 %v431, %v459
  %461 = vdwg.mxu0
  %462 = vmatpush.bf16.msra.mxu0 %v342
  %463 = vmatpush.bf16.msra.mxu0 %v341
  %464 = vmatpush.bf16.msra.mxu0 %v340
  %465 = vmatpush.bf16.msra.mxu0 %v339
  %466 = vmatpush.bf16.msra.mxu0 %v338
  %467 = vmatpush.bf16.msra.mxu0 %v337
  %468 = vmatpush.bf16.msra.mxu0 %v336
  %469 = vmatpush.bf16.msra.mxu0 %v335
  %470 = vmatmul.bf16.gmra.mxu0 %v154
  %v471 = vpop.f32.mrf.mxu0
  %v472 = vadd.f32 %v443, %v471
  %v473 = vpop.f32.mrf.mxu0
  %v474 = vadd.f32 %v445, %v473
  %475 = vmatmul.bf16.gmra.mxu0 %v158
  %v476 = vpop.f32.mrf.mxu0
  %v477 = vadd.f32 %v448, %v476
  %v478 = vpop.f32.mrf.mxu0
  %v479 = vadd.f32 %v450, %v478
  %480 = vmatmul.bf16.gmra.mxu0 %v162
  %v481 = vpop.f32.mrf.mxu0
  %v482 = vadd.f32 %v453, %v481
  %v483 = vpop.f32.mrf.mxu0
  %v484 = vadd.f32 %v455, %v483
  %485 = vmatmul.bf16.gmra.mxu0 %v166
  %v486 = vpop.f32.mrf.mxu0
  %v487 = vadd.f32 %v458, %v486
  %v488 = vpop.f32.mrf.mxu0
  %v489 = vadd.f32 %v460, %v488
  %490 = vdwg.mxu0
  %vm491 = vcmask 261120
  %v492 = vsel %vm491, %v472, 0.0
  %493 = vadd.xlane.f32.xlu0 %v492
  %v494 = vpop.xlane.xlu0 %493
  %v495 = vsel %vm491, %v474, 0.0
  %496 = vadd.xlane.f32.xlu0 %v495
  %v497 = vpop.xlane.xlu0 %496
  %v498 = vsel %vm491, %v477, 0.0
  %499 = vadd.xlane.f32.xlu0 %v498
  %v500 = vpop.xlane.xlu0 %499
  %v501 = vsel %vm491, %v479, 0.0
  %502 = vadd.xlane.f32.xlu0 %v501
  %v503 = vpop.xlane.xlu0 %502
  %v504 = vsel %vm491, %v482, 0.0
  %505 = vadd.xlane.f32.xlu0 %v504
  %v506 = vpop.xlane.xlu0 %505
  %v507 = vsel %vm491, %v484, 0.0
  %508 = vadd.xlane.f32.xlu0 %v507
  %v509 = vpop.xlane.xlu0 %508
  %v510 = vsel %vm491, %v487, 0.0
  %511 = vadd.xlane.f32.xlu0 %v510
  %v512 = vpop.xlane.xlu0 %511
  %v513 = vsel %vm491, %v489, 0.0
  %514 = vadd.xlane.f32.xlu0 %v513
  %v515 = vpop.xlane.xlu0 %514
  %v516 = vrcp.pop 32.0
  %v517 = vmul.f32 32.0, %v516
  %v518 = vsub.f32 1.0, %v517
  %v519 = vmul.f32 %v516, %v518
  %v520 = vadd.f32 %v516, %v519
  %vm521 = vweird.f32 %v516
  %v522 = vsel %vm521, %v516, %v520
  %v523 = vmul.f32 %v494, %v522
  %v524 = vmul.f32 %v497, %v522
  %v525 = vmul.f32 %v500, %v522
  %v526 = vmul.f32 %v503, %v522
  %v527 = vmul.f32 %v506, %v522
  %v528 = vmul.f32 %v509, %v522
  %v529 = vmul.f32 %v512, %v522
  %v530 = vmul.f32 %v515, %v522
  %v531 = vsub.f32 %v472, %v523
  %v532 = vsub.f32 %v474, %v524
  %v533 = vsub.f32 %v477, %v525
  %v534 = vsub.f32 %v479, %v526
  %v535 = vsub.f32 %v482, %v527
  %v536 = vsub.f32 %v484, %v528
  %v537 = vsub.f32 %v487, %v529
  %v538 = vsub.f32 %v489, %v530
  %v539 = vmul.f32 %v531, %v531
  %v540 = vmul.f32 %v532, %v532
  %v541 = vmul.f32 %v533, %v533
  %v542 = vmul.f32 %v534, %v534
  %v543 = vmul.f32 %v535, %v535
  %v544 = vmul.f32 %v536, %v536
  %v545 = vmul.f32 %v537, %v537
  %v546 = vmul.f32 %v538, %v538
  %v547 = vsel %vm491, %v539, 0.0
  %548 = vadd.xlane.f32.xlu0 %v547
  %v549 = vpop.xlane.xlu0 %548
  %v550 = vsel %vm491, %v540, 0.0
  %551 = vadd.xlane.f32.xlu0 %v550
  %v552 = vpop.xlane.xlu0 %551
  %v553 = vsel %vm491, %v541, 0.0
  %554 = vadd.xlane.f32.xlu0 %v553
  %v555 = vpop.xlane.xlu0 %554
  %v556 = vsel %vm491, %v542, 0.0
  %557 = vadd.xlane.f32.xlu0 %v556
  %v558 = vpop.xlane.xlu0 %557
  %v559 = vsel %vm491, %v543, 0.0
  %560 = vadd.xlane.f32.xlu0 %v559
  %v561 = vpop.xlane.xlu0 %560
  %v562 = vsel %vm491, %v544, 0.0
  %563 = vadd.xlane.f32.xlu0 %v562
  %v564 = vpop.xlane.xlu0 %563
  %v565 = vsel %vm491, %v545, 0.0
  %566 = vadd.xlane.f32.xlu0 %v565
  %v567 = vpop.xlane.xlu0 %566
  %v568 = vsel %vm491, %v546, 0.0
  %569 = vadd.xlane.f32.xlu0 %v568
  %v570 = vpop.xlane.xlu0 %569
  %v571 = vmul.f32 %v549, %v522
  %v572 = vmul.f32 %v552, %v522
  %v573 = vmul.f32 %v555, %v522
  %v574 = vmul.f32 %v558, %v522
  %v575 = vmul.f32 %v561, %v522
  %v576 = vmul.f32 %v564, %v522
  %v577 = vmul.f32 %v567, %v522
  %v578 = vmul.f32 %v570, %v522
  %v579 = vadd.f32 %v571, 1e-05
  %v580 = vadd.f32 %v572, 1e-05
  %v581 = vadd.f32 %v573, 1e-05
  %v582 = vadd.f32 %v574, 1e-05
  %v583 = vadd.f32 %v575, 1e-05
  %v584 = vadd.f32 %v576, 1e-05
  %v585 = vadd.f32 %v577, 1e-05
  %v586 = vadd.f32 %v578, 1e-05
  %v587 = vrsqrt.pop %v579
  %v588 = vmul.f32 %v587, %v579
  %v589 = vmul.f32 %v588, %v587
  %v590 = vmul.f32 0.5, %v589
  %v591 = vsub.f32 1.5, %v590
  %v592 = vmul.f32 %v587, %v591
  %vm593 = vweird.f32 %v579
  %vm594 = vweird.f32 %v587
  %vm595 = vmor %vm593, %vm594
  %v596 = vsel %vm595, %v587, %v592
  %v597 = vrsqrt.pop %v580
  %v598 = vmul.f32 %v597, %v580
  %v599 = vmul.f32 %v598, %v597
  %v600 = vmul.f32 0.5, %v599
  %v601 = vsub.f32 1.5, %v600
  %v602 = vmul.f32 %v597, %v601
  %vm603 = vweird.f32 %v580
  %vm604 = vweird.f32 %v597
  %vm605 = vmor %vm603, %vm604
  %v606 = vsel %vm605, %v597, %v602
  %v607 = vrsqrt.pop %v581
  %v608 = vmul.f32 %v607, %v581
  %v609 = vmul.f32 %v608, %v607
  %v610 = vmul.f32 0.5, %v609
  %v611 = vsub.f32 1.5, %v610
  %v612 = vmul.f32 %v607, %v611
  %vm613 = vweird.f32 %v581
  %vm614 = vweird.f32 %v607
  %vm615 = vmor %vm613, %vm614
  %v616 = vsel %vm615, %v607, %v612
  %v617 = vrsqrt.pop %v582
  %v618 = vmul.f32 %v617, %v582
  %v619 = vmul.f32 %v618, %v617
  %v620 = vmul.f32 0.5, %v619
  %v621 = vsub.f32 1.5, %v620
  %v622 = vmul.f32 %v617, %v621
  %vm623 = vweird.f32 %v582
  %vm624 = vweird.f32 %v617
  %vm625 = vmor %vm623, %vm624
  %v626 = vsel %vm625, %v617, %v622
  %v627 = vrsqrt.pop %v583
  %v628 = vmul.f32 %v627, %v583
  %v629 = vmul.f32 %v628, %v627
  %v630 = vmul.f32 0.5, %v629
  %v631 = vsub.f32 1.5, %v630
  %v632 = vmul.f32 %v627, %v631
  %vm633 = vweird.f32 %v583
  %vm634 = vweird.f32 %v627
  %vm635 = vmor %vm633, %vm634
  %v636 = vsel %vm635, %v627, %v632
  %v637 = vrsqrt.pop %v584
  %v638 = vmul.f32 %v637, %v584
  %v639 = vmul.f32 %v638, %v637
  %v640 = vmul.f32 0.5, %v639
  %v641 = vsub.f32 1.5, %v640
  %v642 = vmul.f32 %v637, %v641
  %vm643 = vweird.f32 %v584
  %vm644 = vweird.f32 %v637
  %vm645 = vmor %vm643, %vm644
  %v646 = vsel %vm645, %v637, %v642
  %v647 = vrsqrt.pop %v585
  %v648 = vmul.f32 %v647, %v585
  %v649 = vmul.f32 %v648, %v647
  %v650 = vmul.f32 0.5, %v649
  %v651 = vsub.f32 1.5, %v650
  %v652 = vmul.f32 %v647, %v651
  %vm653 = vweird.f32 %v585
  %vm654 = vweird.f32 %v647
  %vm655 = vmor %vm653, %vm654
  %v656 = vsel %vm655, %v647, %v652
  %v657 = vrsqrt.pop %v586
  %v658 = vmul.f32 %v657, %v586
  %v659 = vmul.f32 %v658, %v657
  %v660 = vmul.f32 0.5, %v659
  %v661 = vsub.f32 1.5, %v660
  %v662 = vmul.f32 %v657, %v661
  %vm663 = vweird.f32 %v586
  %vm664 = vweird.f32 %v657
  %vm665 = vmor %vm663, %vm664
  %v666 = vsel %vm665, %v657, %v662
  %v667 = vmul.f32 %v531, %v596
  %v668 = vmul.f32 %v532, %v606
  %v669 = vmul.f32 %v533, %v616
  %v670 = vmul.f32 %v534, %v626
  %v671 = vmul.f32 %v535, %v636
  %v672 = vmul.f32 %v536, %v646
  %v673 = vmul.f32 %v537, %v656
  %v674 = vmul.f32 %v538, %v666
  %v675 = vld [vmem:[%s2] sm:$0xff]
  %v676 = vld [vmem:[%s2 + $0x8] sm:$0xff]
  %v677 = vld [vmem:[%s2 + $0x10] sm:$0xff]
  %v678 = vld [vmem:[%s2 + $0x18] sm:$0xff]
  %v679 = vld [vmem:[%s2 + $0x20] sm:$0xff]
  %v680 = vld [vmem:[%s2 + $0x28] sm:$0xff]
  %v681 = vld [vmem:[%s2 + $0x30] sm:$0xff]
  %v682 = vld [vmem:[%s2 + $0x38] sm:$0xff]
  %684 = vset.pattern.permute.xlu0 0
  %685 = vperm.xlu0 %684, %v675
  %v686 = vpop.permute.xlu0 %685
  %689 = vset.pattern.permute.xlu0 0
  %690 = vperm.xlu0 %689, %v676
  %v691 = vpop.permute.xlu0 %690
  %694 = vset.pattern.permute.xlu0 0
  %695 = vperm.xlu0 %694, %v677
  %v696 = vpop.permute.xlu0 %695
  %699 = vset.pattern.permute.xlu0 0
  %700 = vperm.xlu0 %699, %v678
  %v701 = vpop.permute.xlu0 %700
  %704 = vset.pattern.permute.xlu0 0
  %705 = vperm.xlu0 %704, %v679
  %v706 = vpop.permute.xlu0 %705
  %709 = vset.pattern.permute.xlu0 0
  %710 = vperm.xlu0 %709, %v680
  %v711 = vpop.permute.xlu0 %710
  %714 = vset.pattern.permute.xlu0 0
  %715 = vperm.xlu0 %714, %v681
  %v716 = vpop.permute.xlu0 %715
  %719 = vset.pattern.permute.xlu0 0
  %720 = vperm.xlu0 %719, %v682
  %v721 = vpop.permute.xlu0 %720
  %v723 = vmul.f32 %v667, %v686
  %v724 = vmul.f32 %v668, %v691
  %v725 = vmul.f32 %v669, %v696
  %v726 = vmul.f32 %v670, %v701
  %v727 = vmul.f32 %v671, %v706
  %v728 = vmul.f32 %v672, %v711
  %v729 = vmul.f32 %v673, %v716
  %v730 = vmul.f32 %v674, %v721
  %v731 = vld [vmem:[%s3] sm:$0xff]
  %v732 = vld [vmem:[%s3 + $0x8] sm:$0xff]
  %v733 = vld [vmem:[%s3 + $0x10] sm:$0xff]
  %v734 = vld [vmem:[%s3 + $0x18] sm:$0xff]
  %v735 = vld [vmem:[%s3 + $0x20] sm:$0xff]
  %v736 = vld [vmem:[%s3 + $0x28] sm:$0xff]
  %v737 = vld [vmem:[%s3 + $0x30] sm:$0xff]
  %v738 = vld [vmem:[%s3 + $0x38] sm:$0xff]
  %740 = vset.pattern.permute.xlu0 0
  %741 = vperm.xlu0 %740, %v731
  %v742 = vpop.permute.xlu0 %741
  %745 = vset.pattern.permute.xlu0 0
  %746 = vperm.xlu0 %745, %v732
  %v747 = vpop.permute.xlu0 %746
  %750 = vset.pattern.permute.xlu0 0
  %751 = vperm.xlu0 %750, %v733
  %v752 = vpop.permute.xlu0 %751
  %755 = vset.pattern.permute.xlu0 0
  %756 = vperm.xlu0 %755, %v734
  %v757 = vpop.permute.xlu0 %756
  %760 = vset.pattern.permute.xlu0 0
  %761 = vperm.xlu0 %760, %v735
  %v762 = vpop.permute.xlu0 %761
  %765 = vset.pattern.permute.xlu0 0
  %766 = vperm.xlu0 %765, %v736
  %v767 = vpop.permute.xlu0 %766
  %770 = vset.pattern.permute.xlu0 0
  %771 = vperm.xlu0 %770, %v737
  %v772 = vpop.permute.xlu0 %771
  %775 = vset.pattern.permute.xlu0 0
  %776 = vperm.xlu0 %775, %v738
  %v777 = vpop.permute.xlu0 %776
  %v779 = vadd.f32 %v723, %v742
  %v780 = vadd.f32 %v724, %v747
  %v781 = vadd.f32 %v725, %v752
  %v782 = vadd.f32 %v726, %v757
  %v783 = vadd.f32 %v727, %v762
  %v784 = vadd.f32 %v728, %v767
  %v785 = vadd.f32 %v729, %v772
  %v786 = vadd.f32 %v730, %v777
  %vm787 = vcmp.gt.f32.partialorder %v779, 0.0
  %vm788 = vcmp.gt.f32.partialorder %v780, 0.0
  %vm789 = vcmp.gt.f32.partialorder %v781, 0.0
  %vm790 = vcmp.gt.f32.partialorder %v782, 0.0
  %vm791 = vcmp.gt.f32.partialorder %v783, 0.0
  %vm792 = vcmp.gt.f32.partialorder %v784, 0.0
  %vm793 = vcmp.gt.f32.partialorder %v785, 0.0
  %vm794 = vcmp.gt.f32.partialorder %v786, 0.0
  %v795 = vmul.f32 %v779, 0.2
  %v796 = vmul.f32 %v780, 0.2
  %v797 = vmul.f32 %v781, 0.2
  %v798 = vmul.f32 %v782, 0.2
  %v799 = vmul.f32 %v783, 0.2
  %v800 = vmul.f32 %v784, 0.2
  %v801 = vmul.f32 %v785, 0.2
  %v802 = vmul.f32 %v786, 0.2
  %v803 = vsel %vm787, %v779, %v795
  %v804 = vsel %vm788, %v780, %v796
  %v805 = vsel %vm789, %v781, %v797
  %v806 = vsel %vm790, %v782, %v798
  %v807 = vsel %vm791, %v783, %v799
  %v808 = vsel %vm792, %v784, %v800
  %v809 = vsel %vm793, %v785, %v801
  %v810 = vsel %vm794, %v786, %v802
  %v811 = vld [vmem:[%s4] sm:$0xff]
  %v812 = vld [vmem:[%s4 + $0x8] sm:$0xff]
  %v813 = vld [vmem:[%s4 + $0x10] sm:$0xff]
  %v814 = vld [vmem:[%s4 + $0x18] sm:$0xff]
  %v815 = vld [vmem:[%s4 + $0x20] sm:$0xff]
  %v816 = vld [vmem:[%s4 + $0x28] sm:$0xff]
  %v817 = vld [vmem:[%s4 + $0x30] sm:$0xff]
  %v818 = vld [vmem:[%s4 + $0x38] sm:$0xff]
  %v819 = vmul.f32 %v803, %v811
  %v820 = vmul.f32 %v804, %v812
  %v821 = vmul.f32 %v805, %v813
  %v822 = vmul.f32 %v806, %v814
  %v823 = vmul.f32 %v807, %v815
  %v824 = vmul.f32 %v808, %v816
  %v825 = vmul.f32 %v809, %v817
  %v826 = vmul.f32 %v810, %v818
  %v827 = vld [vmem:[%s5] sm:$0xff]
  %v828 = vld [vmem:[%s5 + $0x8] sm:$0xff]
  %v829 = vld [vmem:[%s5 + $0x10] sm:$0xff]
  %v830 = vld [vmem:[%s5 + $0x18] sm:$0xff]
  %v832 = vsel %vm491, %v819, 0
  %v835 = vsel %vm491, %v820, 0
  %v838 = vsel %vm491, %v821, 0
  %v841 = vsel %vm491, %v822, 0
  %v844 = vsel %vm491, %v823, 0
  %v847 = vsel %vm491, %v824, 0
  %v850 = vsel %vm491, %v825, 0
  %v853 = vsel %vm491, %v826, 0
  %855 = vmatpush.msra.mxu0 0.0
  %856 = vmatpush.msra.mxu0 0.0
  %857 = vmatpush.msra.mxu0 0.0
  %858 = vmatpush.msra.mxu0 0.0
  %859 = vmatpush.msra.mxu0 0.0
  %860 = vmatpush.msra.mxu0 0.0
  %861 = vmatpush.msra.mxu0 0.0
  %862 = vmatpush.msra.mxu0 0.0
  %863 = vmatpush.msra.mxu0 0.0
  %864 = vmatpush.msra.mxu0 0.0
  %865 = vmatpush.msra.mxu0 0.0
  %866 = vmatpush.msra.mxu0 0.0
  %867 = vmatpush.msra.mxu0 %v830
  %868 = vmatpush.msra.mxu0 %v829
  %869 = vmatpush.msra.mxu0 %v828
  %870 = vmatpush.msra.mxu0 %v827
  %871 = vmatmul.f32.gmra.mxu0 %v832
  %v872 = vpop.f32.mrf.mxu0
  %v873 = vadd.f32 0.0, %v872
  %874 = vmatmul.f32.gmra.mxu0 %v835
  %v875 = vpop.f32.mrf.mxu0
  %v876 = vadd.f32 0.0, %v875
  %877 = vmatmul.f32.gmra.mxu0 %v838
  %v878 = vpop.f32.mrf.mxu0
  %v879 = vadd.f32 0.0, %v878
  %880 = vmatmul.f32.gmra.mxu0 %v841
  %v881 = vpop.f32.mrf.mxu0
  %v882 = vadd.f32 0.0, %v881
  %883 = vmatmul.f32.gmra.mxu0 %v844
  %v884 = vpop.f32.mrf.mxu0
  %v885 = vadd.f32 0.0, %v884
  %886 = vmatmul.f32.gmra.mxu0 %v847
  %v887 = vpop.f32.mrf.mxu0
  %v888 = vadd.f32 0.0, %v887
  %889 = vmatmul.f32.gmra.mxu0 %v850
  %v890 = vpop.f32.mrf.mxu0
  %v891 = vadd.f32 0.0, %v890
  %892 = vmatmul.f32.gmra.mxu0 %v853
  %v893 = vpop.f32.mrf.mxu0
  %v894 = vadd.f32 0.0, %v893
  %895 = vdwg.mxu0
  %v896 = vadd.f32 %v873, %v876
  %v897 = vadd.f32 %v896, %v879
  %v898 = vadd.f32 %v897, %v882
  %v899 = vadd.f32 %v898, %v885
  %v900 = vadd.f32 %v899, %v888
  %v901 = vadd.f32 %v900, %v891
  %v902 = vadd.f32 %v901, %v894
  %v903 = vrot.slane %v902, 4
  %v904 = vadd.f32 %v902, %v903
  %v905 = vrot.slane %v904, 2
  %v906 = vadd.f32 %v904, %v905
  %v907 = vrot.slane %v906, 1
  %v908 = vadd.f32 %v906, %v907
  %v909 = vxor.u32 %v908, 2147483648
  %v910 = vmul.f32 %v909, 1.442695
  %v911 = vpow.pop %v910
  %v912 = vadd.f32 %v911, 1.0
  %v913 = vrcp.pop %v912
  %v914 = vmul.f32 %v912, %v913
  %v915 = vsub.f32 1.0, %v914
  %v916 = vmul.f32 %v913, %v915
  %v917 = vadd.f32 %v913, %v916
  %vm918 = vweird.f32 %v912
  %vm919 = vweird.f32 %v913
  %vm920 = vmor %vm918, %vm919
  %v921 = vsel %vm920, %v913, %v917
  %v922 = vand.u32 2147483647, %v912
  %vm923 = vcmp.eq.f32.partialorder %v922, 8.507059e+37
  %v924 = vand.u32 %v912, 2147483648
  %v925 = vor.u32 1.1754944e-38, %v924
  %v926 = vsel %vm923, %v925, %v921
  %v927 = vmul.f32 1.0, %v926
  %928 = vst [vmem:[%s6] sm:$0x1] %v927
  // Predicated region
  $region26: #{discriminator_forward.7} parent=0 // pred_check
    _
  $region27: #{discriminator_forward.7} parent=0 // pred_check_branch
    %930 = sbr.rel (0) target = $region29
  $region28: #{discriminator_forward.7} parent=0 // pred_region
    _
  $region29: #{discriminator_forward.7} parent=0 // pred_fallthru
    _
  // Predicated region
  $region30: #{discriminator_forward.7} parent=0 // pred_check
    _
  $region31: #{discriminator_forward.7} parent=0 // pred_check_branch
    %932 = sbr.rel (0) target = $region33
  $region32: #{discriminator_forward.7} parent=0 // pred_region
    _
  $region33: #{discriminator_forward.7} parent=0 // pred_fallthru
    _

</llo_original>
